<compile_context>
chip_gen: v5e
topology: v5e:2x2
jax: 0.10.0
libtpu: 0.0.40
codegen_flags: <defaults>
</compile_context>

<pallas_src>
import jax
import jax.numpy as jnp
from jax.experimental import pallas as pl
from jax.experimental.pallas import tpu as pltpu

# ---- small synthetic CAV-MAE config ---------------------------------------
PATCH = 16           # Conv2d kernel/stride of patch_embed_a
EMBED_DIM = 32
NUM_HEADS = 4
HEAD_DIM = EMBED_DIM // NUM_HEADS
MLP_DIM = 4 * EMBED_DIM
DEPTH_A = 1          # audio-specific blocks (blocks_a)
DEPTH_U = 1          # unified blocks (blocks_u, called with modality 'a')
NUM_BLOCKS = DEPTH_A + DEPTH_U
LN_EPS = 1e-6        # timm ViT LayerNorm eps used by CAV-MAE
ATTN_SCALE = 1.0 / (HEAD_DIM ** 0.5)


# ---------------------------------------------------------------------------
# Fused Pallas kernel: whole forward_audio for one batch sample per grid step
# ---------------------------------------------------------------------------
def _layernorm(x, g, b):
    m = jnp.mean(x, axis=-1, keepdims=True)
    v = jnp.mean((x - m) ** 2, axis=-1, keepdims=True)
    return (x - m) * jax.lax.rsqrt(v + LN_EPS) * g + b


def _mm(a_f32, w_bf16):
    # bf16 MXU operands, f32 accumulation.
    return jnp.dot(a_f32.astype(jnp.bfloat16), w_bf16,
                   preferred_element_type=jnp.float32)


def _fused_forward_kernel(patches_ref, patch_w_ref, patch_b_ref, pos_ref,
                          ln1_g_ref, ln1_b_ref, qkv_w_ref, qkv_b_ref,
                          proj_w_ref, proj_b_ref, ln2_g_ref, ln2_b_ref,
                          fc1_w_ref, fc1_b_ref, fc2_w_ref, fc2_b_ref,
                          norm_g_ref, norm_b_ref, out_ref):
    # --- patch embed (Conv2d 16x16 stride 16 as a matmul) + positional terms ---
    x = _mm(patches_ref[0], patch_w_ref[...]) + patch_b_ref[...]   # [Np, D] f32
    x = x + pos_ref[0]                                             # pos_embed_a + modality_a

    # --- blocks_a followed by blocks_u (weights stacked along a layer axis) ---
    for l in range(NUM_BLOCKS):                                    # static unroll
        # ---- attention ----
        h = _layernorm(x, ln1_g_ref[l], ln1_b_ref[l])
        qkv = _mm(h, qkv_w_ref[l]) + qkv_b_ref[l]                  # [Np, 3D]
        q = qkv[:, 0:EMBED_DIM] * ATTN_SCALE                       # fold 1/sqrt(dh) into q
        k = qkv[:, EMBED_DIM:2 * EMBED_DIM]
        v = qkv[:, 2 * EMBED_DIM:3 * EMBED_DIM]

        head_outs = []
        for hd in range(NUM_HEADS):                                # static unroll
            lo = hd * HEAD_DIM
            hi = lo + HEAD_DIM
            qh = q[:, lo:hi].astype(jnp.bfloat16)
            kh = k[:, lo:hi].astype(jnp.bfloat16)
            vh = v[:, lo:hi].astype(jnp.bfloat16)
            s = jax.lax.dot_general(qh, kh, (((1,), (1,)), ((), ())),
                                    preferred_element_type=jnp.float32)   # [Np, Np]
            s = s - jnp.max(s, axis=-1, keepdims=True)
            p = jnp.exp(s)
            p = p * pl.reciprocal(jnp.sum(p, axis=-1, keepdims=True), approx=True)
            oh = jnp.dot(p.astype(jnp.bfloat16), vh,
                         preferred_element_type=jnp.float32)              # [Np, dh]
            head_outs.append(oh)
        # merge heads along lanes in-register (lane-dense operand for proj matmul)
        attn_in = jnp.concatenate(head_outs, axis=-1)              # [Np, D]

        attn = _mm(attn_in, proj_w_ref[l]) + proj_b_ref[l]
        x = x + attn                                               # residual in VMEM/vregs

        # ---- MLP ----
        h = _layernorm(x, ln2_g_ref[l], ln2_b_ref[l])
        h = _mm(h, fc1_w_ref[l]) + fc1_b_ref[l]
        # TODO(synk): PyTorch nn.GELU (CAV-MAE/timm default) is the exact erf
        # GELU; tanh approximation used here for a Mosaic-friendly EUP lowering.
        h = jax.nn.gelu(h, approximate=True)
        h = _mm(h, fc2_w_ref[l]) + fc2_b_ref[l]
        x = x + h

    # --- final norm_a ---
    x = _layernorm(x, norm_g_ref[...], norm_b_ref[...])
    out_ref[0] = x.astype(out_ref.dtype)


# ---------------------------------------------------------------------------
# JAX wrapper (layout plumbing only) + pallas_call
# ---------------------------------------------------------------------------
def patchify(wavs):
    """fbank [B,T,F] -> unsqueeze(1) -> transpose(2,3) -> 16x16 patches [B,Np,256]."""
    B, T, F = wavs.shape
    a = wavs[:, None, :, :]                 # unsqueeze(1)    -> [B, 1, T, F]
    a = jnp.transpose(a, (0, 1, 3, 2))      # transpose(2, 3) -> [B, 1, F, T]  (NCHW)
    _, C, H, W = a.shape
    a = a.reshape(B, C, H // PATCH, PATCH, W // PATCH, PATCH)
    a = jnp.transpose(a, (0, 2, 4, 1, 3, 5))            # [B, H/p, W/p, C, p, p]
    return a.reshape(B, (H // PATCH) * (W // PATCH), C * PATCH * PATCH)


def forward_audio(wavs, params):
    """CAVMAE.forward_audio: fbank [B, T, F] -> features [B, N_patches, D]."""
    patches = patchify(wavs)
    B, Np, PP = patches.shape
    L, D, M = NUM_BLOCKS, EMBED_DIM, MLP_DIM

    # pos_embed_a + modality_a combined once (parameter-only preprocessing).
    pos_mod = params["pos_embed_a"] + params["modality_a"]        # [1, Np, D]

    bf = lambda w: w.astype(jnp.bfloat16)                         # MXU operands
    full2 = lambda shp: pl.BlockSpec(shp, lambda b: (0, 0))
    full3 = lambda shp: pl.BlockSpec(shp, lambda b: (0, 0, 0))

    out = pl.pallas_call(
        _fused_forward_kernel,
        out_shape=jax.ShapeDtypeStruct((B, Np, D), jnp.float32),
        grid=(B,),
        in_specs=[
            pl.BlockSpec((1, Np, PP), lambda b: (b, 0, 0)),       # patches (per sample)
            full2((PP, D)),                                       # patch_w   (bf16)
            full2((1, D)),                                        # patch_b
            full3((1, Np, D)),                                    # pos+modality
            full3((L, 1, D)), full3((L, 1, D)),                   # ln1 g / b
            full3((L, D, 3 * D)), full3((L, 1, 3 * D)),           # qkv w / b
            full3((L, D, D)), full3((L, 1, D)),                   # proj w / b
            full3((L, 1, D)), full3((L, 1, D)),                   # ln2 g / b
            full3((L, D, M)), full3((L, 1, M)),                   # fc1 w / b
            full3((L, M, D)), full3((L, 1, D)),                   # fc2 w / b
            full2((1, D)), full2((1, D)),                         # final norm g / b
        ],
        out_specs=pl.BlockSpec((1, Np, D), lambda b: (b, 0, 0)),
        compiler_params=pltpu.CompilerParams(
            dimension_semantics=("parallel",),                    # batch across TCs (v7x)
            vmem_limit_bytes=32 * 1024 * 1024,
        ),
    )(
        patches,
        bf(params["patch_w"]), params["patch_b"].reshape(1, D),
        pos_mod,
        params["ln1_g"], params["ln1_b"],
        bf(params["qkv_w"]), params["qkv_b"],
        bf(params["proj_w"]), params["proj_b"],
        params["ln2_g"], params["ln2_b"],
        bf(params["fc1_w"]), params["fc1_b"],
        bf(params["fc2_w"]), params["fc2_b"],
        params["norm_a_g"].reshape(1, D), params["norm_a_b"].reshape(1, D),
    )
    return out


def upstream_expert_forward(wavs, params, lens=None):
    feats = forward_audio(wavs, params)
    return {"hidden_states": feats}


# ---------------------------------------------------------------------------
# Pure-JAX f32 reference (for numerical validation of the fused kernel)
# ---------------------------------------------------------------------------
def _ln_ref(x, g, b):
    m = jnp.mean(x, axis=-1, keepdims=True)
    v = jnp.mean((x - m) ** 2, axis=-1, keepdims=True)
    return (x - m) * jax.lax.rsqrt(v + LN_EPS) * g + b


def forward_audio_ref(wavs, params):
    patches = patchify(wavs)
    B, Np, _ = patches.shape
    x = patches @ params["patch_w"] + params["patch_b"]
    x = x + params["pos_embed_a"] + params["modality_a"]
    for l in range(NUM_BLOCKS):
        h = _ln_ref(x, params["ln1_g"][l], params["ln1_b"][l])
        qkv = h @ params["qkv_w"][l] + params["qkv_b"][l]
        q, k, v = jnp.split(qkv, 3, axis=-1)
        q = (q * ATTN_SCALE).reshape(B, Np, NUM_HEADS, HEAD_DIM).transpose(0, 2, 1, 3)
        k = k.reshape(B, Np, NUM_HEADS, HEAD_DIM).transpose(0, 2, 1, 3)
        v = v.reshape(B, Np, NUM_HEADS, HEAD_DIM).transpose(0, 2, 1, 3)
        s = jnp.einsum("bhqd,bhkd->bhqk", q, k)
        p = jax.nn.softmax(s, axis=-1)
        o = jnp.einsum("bhqk,bhkd->bhqd", p, v)
        o = o.transpose(0, 2, 1, 3).reshape(B, Np, EMBED_DIM)
        x = x + o @ params["proj_w"][l] + params["proj_b"][l]
        h = _ln_ref(x, params["ln2_g"][l], params["ln2_b"][l])
        h = jax.nn.gelu(h @ params["fc1_w"][l] + params["fc1_b"][l], approximate=True)
        x = x + h @ params["fc2_w"][l] + params["fc2_b"][l]
    return _ln_ref(x, params["norm_a_g"], params["norm_a_b"])


# ---------------------------------------------------------------------------
# Deterministic synthetic parameter init (no checkpoint load), layer-stacked
# ---------------------------------------------------------------------------
def init_params(key, num_patches):
    keys = iter(jax.random.split(key, 16))

    def nrm(shape, scale=0.02):
        return scale * jax.random.normal(next(keys), shape, dtype=jnp.float32)

    L, D, M = NUM_BLOCKS, EMBED_DIM, MLP_DIM
    return {
        "patch_w": nrm((PATCH * PATCH, D)),
        "patch_b": jnp.zeros((D,), jnp.float32),
        "pos_embed_a": nrm((1, num_patches, D)),
        "modality_a": nrm((1, 1, D)),
        "ln1_g": jnp.ones((L, 1, D), jnp.float32),
        "ln1_b": jnp.zeros((L, 1, D), jnp.float32),
        "qkv_w": nrm((L, D, 3 * D)),
        "qkv_b": jnp.zeros((L, 1, 3 * D), jnp.float32),
        "proj_w": nrm((L, D, D)),
        "proj_b": jnp.zeros((L, 1, D), jnp.float32),
        "ln2_g": jnp.ones((L, 1, D), jnp.float32),
        "ln2_b": jnp.zeros((L, 1, D), jnp.float32),
        "fc1_w": nrm((L, D, M)),
        "fc1_b": jnp.zeros((L, 1, M), jnp.float32),
        "fc2_w": nrm((L, M, D)),
        "fc2_b": jnp.zeros((L, 1, D), jnp.float32),
        "norm_a_g": jnp.ones((D,), jnp.float32),
        "norm_a_b": jnp.zeros((D,), jnp.float32),
    }


if __name__ == "__main__":
    # Small fbank-like input: B=2, T=64 frames, F=16 mel bins (both divisible by 16).
    B, T, F = 2, 64, 16
    wavs = jax.random.normal(jax.random.PRNGKey(0), (B, T, F), dtype=jnp.float32)

    num_patches = (F // PATCH) * (T // PATCH)   # spectrogram transposed to [B,1,F,T]
    params = init_params(jax.random.PRNGKey(42), num_patches)

    fwd = jax.jit(upstream_expert_forward)
    out = fwd(wavs, params)
    feats = jax.block_until_ready(out["hidden_states"])
    assert feats.shape == (B, num_patches, EMBED_DIM)

    # Numerical check against a plain-JAX f32 reference (bf16 MXU tolerance).
    ref = forward_audio_ref(wavs, params)
    max_err = float(jnp.max(jnp.abs(feats - ref)))
    assert max_err < 0.15, f"max abs diff vs f32 reference: {max_err}"

    print("KERNEL_OK")
</pallas_src>

<mosaic_0001>
module attributes {stable_mosaic.version = 11 : i64} {
  func.func @_fused_forward_kernel(%arg0: i32, %arg1: memref<1x4x256xf32, #tpu.memory_space<vmem>>, %arg2: memref<256x32xbf16, #tpu.memory_space<vmem>>, %arg3: memref<1x32xf32, #tpu.memory_space<vmem>>, %arg4: memref<1x4x32xf32, #tpu.memory_space<vmem>>, %arg5: memref<2x1x32xf32, #tpu.memory_space<vmem>>, %arg6: memref<2x1x32xf32, #tpu.memory_space<vmem>>, %arg7: memref<2x32x96xbf16, #tpu.memory_space<vmem>>, %arg8: memref<2x1x96xf32, #tpu.memory_space<vmem>>, %arg9: memref<2x32x32xbf16, #tpu.memory_space<vmem>>, %arg10: memref<2x1x32xf32, #tpu.memory_space<vmem>>, %arg11: memref<2x1x32xf32, #tpu.memory_space<vmem>>, %arg12: memref<2x1x32xf32, #tpu.memory_space<vmem>>, %arg13: memref<2x32x128xbf16, #tpu.memory_space<vmem>>, %arg14: memref<2x1x128xf32, #tpu.memory_space<vmem>>, %arg15: memref<2x128x32xbf16, #tpu.memory_space<vmem>>, %arg16: memref<2x1x32xf32, #tpu.memory_space<vmem>>, %arg17: memref<1x32xf32, #tpu.memory_space<vmem>>, %arg18: memref<1x32xf32, #tpu.memory_space<vmem>>, %arg19: memref<1x4x32xf32, #tpu.memory_space<vmem>>) attributes {dimension_semantics = [#tpu.dimension_semantics<parallel>], iteration_bounds = array<i64: 2>, scalar_prefetch = 0 : i64, scratch_operands = 0 : i64, tpu.core_type = #tpu.core_type<tc>, window_params = [{transform_indices = @transform_0, window_bounds = array<i64: 1, 4, 256>}, {pipeline_mode = #tpu.pipeline_mode<synchronous>, transform_indices = @transform_1, window_bounds = array<i64: 256, 32>}, {pipeline_mode = #tpu.pipeline_mode<synchronous>, transform_indices = @transform_2, window_bounds = array<i64: 1, 32>}, {pipeline_mode = #tpu.pipeline_mode<synchronous>, transform_indices = @transform_3, window_bounds = array<i64: 1, 4, 32>}, {pipeline_mode = #tpu.pipeline_mode<synchronous>, transform_indices = @transform_4, window_bounds = array<i64: 2, 1, 32>}, {pipeline_mode = #tpu.pipeline_mode<synchronous>, transform_indices = @transform_5, window_bounds = array<i64: 2, 1, 32>}, {pipeline_mode = #tpu.pipeline_mode<synchronous>, transform_indices = @transform_6, window_bounds = array<i64: 2, 32, 96>}, {pipeline_mode = #tpu.pipeline_mode<synchronous>, transform_indices = @transform_7, window_bounds = array<i64: 2, 1, 96>}, {pipeline_mode = #tpu.pipeline_mode<synchronous>, transform_indices = @transform_8, window_bounds = array<i64: 2, 32, 32>}, {pipeline_mode = #tpu.pipeline_mode<synchronous>, transform_indices = @transform_9, window_bounds = array<i64: 2, 1, 32>}, {pipeline_mode = #tpu.pipeline_mode<synchronous>, transform_indices = @transform_10, window_bounds = array<i64: 2, 1, 32>}, {pipeline_mode = #tpu.pipeline_mode<synchronous>, transform_indices = @transform_11, window_bounds = array<i64: 2, 1, 32>}, {pipeline_mode = #tpu.pipeline_mode<synchronous>, transform_indices = @transform_12, window_bounds = array<i64: 2, 32, 128>}, {pipeline_mode = #tpu.pipeline_mode<synchronous>, transform_indices = @transform_13, window_bounds = array<i64: 2, 1, 128>}, {pipeline_mode = #tpu.pipeline_mode<synchronous>, transform_indices = @transform_14, window_bounds = array<i64: 2, 128, 32>}, {pipeline_mode = #tpu.pipeline_mode<synchronous>, transform_indices = @transform_15, window_bounds = array<i64: 2, 1, 32>}, {pipeline_mode = #tpu.pipeline_mode<synchronous>, transform_indices = @transform_16, window_bounds = array<i64: 1, 32>}, {pipeline_mode = #tpu.pipeline_mode<synchronous>, transform_indices = @transform_17, window_bounds = array<i64: 1, 32>}, {transform_indices = @transform_18, window_bounds = array<i64: 1, 4, 32>}]} {
    %c0 = arith.constant 0 : index
    %c0_0 = arith.constant 0 : index
    %c0_1 = arith.constant 0 : index
    %0 = vector.load %arg1[%c0, %c0_0, %c0_1] : memref<1x4x256xf32, #tpu.memory_space<vmem>>, vector<1x4x256xf32>
    %1 = vector.shape_cast %0 : vector<1x4x256xf32> to vector<4x256xf32>
    %c0_2 = arith.constant 0 : index
    %c0_3 = arith.constant 0 : index
    %2 = vector.load %arg2[%c0_2, %c0_3] : memref<256x32xbf16, #tpu.memory_space<vmem>>, vector<256x32xbf16>
    %3 = arith.truncf %1 : vector<4x256xf32> to vector<4x256xbf16>
    %cst = arith.constant dense<0.000000e+00> : vector<4x32xf32>
    %4 = tpu.matmul %3, %2, %cst {dimension_numbers = #tpu.dot_dimension_numbers<[1], [0], [0], [1], [0, 0, 1, 1], [], []>} : vector<4x256xbf16>, vector<256x32xbf16>, vector<4x32xf32> -> vector<4x32xf32>
    %c0_4 = arith.constant 0 : index
    %c0_5 = arith.constant 0 : index
    %5 = vector.load %arg3[%c0_4, %c0_5] : memref<1x32xf32, #tpu.memory_space<vmem>>, vector<1x32xf32>
    %6 = vector.broadcast %5 : vector<1x32xf32> to vector<4x32xf32>
    %7 = arith.addf %4, %6 : vector<4x32xf32>
    %c0_6 = arith.constant 0 : index
    %c0_7 = arith.constant 0 : index
    %c0_8 = arith.constant 0 : index
    %8 = vector.load %arg4[%c0_6, %c0_7, %c0_8] : memref<1x4x32xf32, #tpu.memory_space<vmem>>, vector<1x4x32xf32>
    %9 = vector.shape_cast %8 : vector<1x4x32xf32> to vector<4x32xf32>
    %10 = arith.addf %7, %9 : vector<4x32xf32>
    %c0_9 = arith.constant 0 : index
    %c0_10 = arith.constant 0 : index
    %c0_11 = arith.constant 0 : index
    %11 = vector.load %arg5[%c0_9, %c0_10, %c0_11] : memref<2x1x32xf32, #tpu.memory_space<vmem>>, vector<1x1x32xf32>
    %12 = vector.shape_cast %11 : vector<1x1x32xf32> to vector<1x32xf32>
    %c0_12 = arith.constant 0 : index
    %c0_13 = arith.constant 0 : index
    %c0_14 = arith.constant 0 : index
    %13 = vector.load %arg6[%c0_12, %c0_13, %c0_14] : memref<2x1x32xf32, #tpu.memory_space<vmem>>, vector<1x1x32xf32>
    %14 = vector.shape_cast %13 : vector<1x1x32xf32> to vector<1x32xf32>
    %cst_15 = arith.constant dense<0.000000e+00> : vector<4xf32>
    %15 = vector.multi_reduction <add>, %10, %cst_15 [1] : vector<4x32xf32> to vector<4xf32>
    %16 = vector.shape_cast %15 : vector<4xf32> to vector<4x1xf32>
    %cst_16 = arith.constant 3.200000e+01 : f32
    %17 = vector.broadcast %cst_16 : f32 to vector<4x1xf32>
    %18 = arith.divf %16, %17 : vector<4x1xf32>
    %19 = vector.broadcast %18 : vector<4x1xf32> to vector<4x32xf32>
    %20 = arith.subf %10, %19 : vector<4x32xf32>
    %21 = arith.mulf %20, %20 : vector<4x32xf32>
    %cst_17 = arith.constant dense<0.000000e+00> : vector<4xf32>
    %22 = vector.multi_reduction <add>, %21, %cst_17 [1] : vector<4x32xf32> to vector<4xf32>
    %23 = vector.shape_cast %22 : vector<4xf32> to vector<4x1xf32>
    %cst_18 = arith.constant 3.200000e+01 : f32
    %24 = vector.broadcast %cst_18 : f32 to vector<4x1xf32>
    %25 = arith.divf %23, %24 : vector<4x1xf32>
    %26 = vector.broadcast %18 : vector<4x1xf32> to vector<4x32xf32>
    %27 = arith.subf %10, %26 : vector<4x32xf32>
    %cst_19 = arith.constant 9.99999997E-7 : f32
    %28 = vector.broadcast %cst_19 : f32 to vector<4x1xf32>
    %29 = arith.addf %25, %28 : vector<4x1xf32>
    %30 = math.rsqrt %29 : vector<4x1xf32>
    %31 = vector.broadcast %30 : vector<4x1xf32> to vector<4x32xf32>
    %32 = arith.mulf %27, %31 : vector<4x32xf32>
    %33 = vector.broadcast %12 : vector<1x32xf32> to vector<4x32xf32>
    %34 = arith.mulf %32, %33 : vector<4x32xf32>
    %35 = vector.broadcast %14 : vector<1x32xf32> to vector<4x32xf32>
    %36 = arith.addf %34, %35 : vector<4x32xf32>
    %c0_20 = arith.constant 0 : index
    %c0_21 = arith.constant 0 : index
    %c0_22 = arith.constant 0 : index
    %37 = vector.load %arg7[%c0_20, %c0_21, %c0_22] : memref<2x32x96xbf16, #tpu.memory_space<vmem>>, vector<1x32x96xbf16>
    %38 = vector.shape_cast %37 : vector<1x32x96xbf16> to vector<32x96xbf16>
    %39 = arith.truncf %36 : vector<4x32xf32> to vector<4x32xbf16>
    %cst_23 = arith.constant dense<0.000000e+00> : vector<4x96xf32>
    %40 = tpu.matmul %39, %38, %cst_23 {dimension_numbers = #tpu.dot_dimension_numbers<[1], [0], [0], [1], [0, 0, 1, 1], [], []>} : vector<4x32xbf16>, vector<32x96xbf16>, vector<4x96xf32> -> vector<4x96xf32>
    %c0_24 = arith.constant 0 : index
    %c0_25 = arith.constant 0 : index
    %c0_26 = arith.constant 0 : index
    %41 = vector.load %arg8[%c0_24, %c0_25, %c0_26] : memref<2x1x96xf32, #tpu.memory_space<vmem>>, vector<1x1x96xf32>
    %42 = vector.shape_cast %41 : vector<1x1x96xf32> to vector<1x96xf32>
    %43 = vector.broadcast %42 : vector<1x96xf32> to vector<4x96xf32>
    %44 = arith.addf %40, %43 : vector<4x96xf32>
    %45 = vector.extract_strided_slice %44 {offsets = [0, 0], sizes = [4, 32], strides = [1, 1]} : vector<4x96xf32> to vector<4x32xf32>
    %cst_27 = arith.constant 0.353553385 : f32
    %46 = vector.broadcast %cst_27 : f32 to vector<4x32xf32>
    %47 = arith.mulf %45, %46 : vector<4x32xf32>
    %48 = vector.extract_strided_slice %44 {offsets = [0, 32], sizes = [4, 32], strides = [1, 1]} : vector<4x96xf32> to vector<4x32xf32>
    %49 = vector.extract_strided_slice %44 {offsets = [0, 64], sizes = [4, 32], strides = [1, 1]} : vector<4x96xf32> to vector<4x32xf32>
    %50 = vector.extract_strided_slice %47 {offsets = [0, 0], sizes = [4, 8], strides = [1, 1]} : vector<4x32xf32> to vector<4x8xf32>
    %51 = arith.truncf %50 : vector<4x8xf32> to vector<4x8xbf16>
    %52 = vector.extract_strided_slice %48 {offsets = [0, 0], sizes = [4, 8], strides = [1, 1]} : vector<4x32xf32> to vector<4x8xf32>
    %53 = arith.truncf %52 : vector<4x8xf32> to vector<4x8xbf16>
    %54 = vector.extract_strided_slice %49 {offsets = [0, 0], sizes = [4, 8], strides = [1, 1]} : vector<4x32xf32> to vector<4x8xf32>
    %55 = arith.truncf %54 : vector<4x8xf32> to vector<4x8xbf16>
    %cst_28 = arith.constant dense<0.000000e+00> : vector<4x4xf32>
    %56 = tpu.matmul %51, %53, %cst_28 {dimension_numbers = #tpu.dot_dimension_numbers<[1], [1], [0], [0], [0, 0, 1, 0], [], []>} : vector<4x8xbf16>, vector<4x8xbf16>, vector<4x4xf32> -> vector<4x4xf32>
    %cst_29 = arith.constant dense<0xFF800000> : vector<4xf32>
    %57 = vector.multi_reduction <maximumf>, %56, %cst_29 [1] : vector<4x4xf32> to vector<4xf32>
    %58 = vector.shape_cast %57 : vector<4xf32> to vector<4x1xf32>
    %59 = vector.broadcast %58 : vector<4x1xf32> to vector<4x4xf32>
    %60 = arith.subf %56, %59 : vector<4x4xf32>
    %61 = math.exp %60 : vector<4x4xf32>
    %cst_30 = arith.constant dense<0.000000e+00> : vector<4xf32>
    %62 = vector.multi_reduction <add>, %61, %cst_30 [1] : vector<4x4xf32> to vector<4xf32>
    %63 = vector.shape_cast %62 : vector<4xf32> to vector<4x1xf32>
    %64 = tpu.reciprocal %63 {approx = true} : vector<4x1xf32> -> vector<4x1xf32>
    %65 = vector.broadcast %64 : vector<4x1xf32> to vector<4x4xf32>
    %66 = arith.mulf %61, %65 : vector<4x4xf32>
    %67 = arith.truncf %66 : vector<4x4xf32> to vector<4x4xbf16>
    %cst_31 = arith.constant dense<0.000000e+00> : vector<4x8xf32>
    %68 = tpu.matmul %67, %55, %cst_31 {dimension_numbers = #tpu.dot_dimension_numbers<[1], [0], [0], [1], [0, 0, 1, 1], [], []>} : vector<4x4xbf16>, vector<4x8xbf16>, vector<4x8xf32> -> vector<4x8xf32>
    %69 = vector.extract_strided_slice %47 {offsets = [0, 8], sizes = [4, 8], strides = [1, 1]} : vector<4x32xf32> to vector<4x8xf32>
    %70 = arith.truncf %69 : vector<4x8xf32> to vector<4x8xbf16>
    %71 = vector.extract_strided_slice %48 {offsets = [0, 8], sizes = [4, 8], strides = [1, 1]} : vector<4x32xf32> to vector<4x8xf32>
    %72 = arith.truncf %71 : vector<4x8xf32> to vector<4x8xbf16>
    %73 = vector.extract_strided_slice %49 {offsets = [0, 8], sizes = [4, 8], strides = [1, 1]} : vector<4x32xf32> to vector<4x8xf32>
    %74 = arith.truncf %73 : vector<4x8xf32> to vector<4x8xbf16>
    %cst_32 = arith.constant dense<0.000000e+00> : vector<4x4xf32>
    %75 = tpu.matmul %70, %72, %cst_32 {dimension_numbers = #tpu.dot_dimension_numbers<[1], [1], [0], [0], [0, 0, 1, 0], [], []>} : vector<4x8xbf16>, vector<4x8xbf16>, vector<4x4xf32> -> vector<4x4xf32>
    %cst_33 = arith.constant dense<0xFF800000> : vector<4xf32>
    %76 = vector.multi_reduction <maximumf>, %75, %cst_33 [1] : vector<4x4xf32> to vector<4xf32>
    %77 = vector.shape_cast %76 : vector<4xf32> to vector<4x1xf32>
    %78 = vector.broadcast %77 : vector<4x1xf32> to vector<4x4xf32>
    %79 = arith.subf %75, %78 : vector<4x4xf32>
    %80 = math.exp %79 : vector<4x4xf32>
    %cst_34 = arith.constant dense<0.000000e+00> : vector<4xf32>
    %81 = vector.multi_reduction <add>, %80, %cst_34 [1] : vector<4x4xf32> to vector<4xf32>
    %82 = vector.shape_cast %81 : vector<4xf32> to vector<4x1xf32>
    %83 = tpu.reciprocal %82 {approx = true} : vector<4x1xf32> -> vector<4x1xf32>
    %84 = vector.broadcast %83 : vector<4x1xf32> to vector<4x4xf32>
    %85 = arith.mulf %80, %84 : vector<4x4xf32>
    %86 = arith.truncf %85 : vector<4x4xf32> to vector<4x4xbf16>
    %cst_35 = arith.constant dense<0.000000e+00> : vector<4x8xf32>
    %87 = tpu.matmul %86, %74, %cst_35 {dimension_numbers = #tpu.dot_dimension_numbers<[1], [0], [0], [1], [0, 0, 1, 1], [], []>} : vector<4x4xbf16>, vector<4x8xbf16>, vector<4x8xf32> -> vector<4x8xf32>
    %88 = vector.extract_strided_slice %47 {offsets = [0, 16], sizes = [4, 8], strides = [1, 1]} : vector<4x32xf32> to vector<4x8xf32>
    %89 = arith.truncf %88 : vector<4x8xf32> to vector<4x8xbf16>
    %90 = vector.extract_strided_slice %48 {offsets = [0, 16], sizes = [4, 8], strides = [1, 1]} : vector<4x32xf32> to vector<4x8xf32>
    %91 = arith.truncf %90 : vector<4x8xf32> to vector<4x8xbf16>
    %92 = vector.extract_strided_slice %49 {offsets = [0, 16], sizes = [4, 8], strides = [1, 1]} : vector<4x32xf32> to vector<4x8xf32>
    %93 = arith.truncf %92 : vector<4x8xf32> to vector<4x8xbf16>
    %cst_36 = arith.constant dense<0.000000e+00> : vector<4x4xf32>
    %94 = tpu.matmul %89, %91, %cst_36 {dimension_numbers = #tpu.dot_dimension_numbers<[1], [1], [0], [0], [0, 0, 1, 0], [], []>} : vector<4x8xbf16>, vector<4x8xbf16>, vector<4x4xf32> -> vector<4x4xf32>
    %cst_37 = arith.constant dense<0xFF800000> : vector<4xf32>
    %95 = vector.multi_reduction <maximumf>, %94, %cst_37 [1] : vector<4x4xf32> to vector<4xf32>
    %96 = vector.shape_cast %95 : vector<4xf32> to vector<4x1xf32>
    %97 = vector.broadcast %96 : vector<4x1xf32> to vector<4x4xf32>
    %98 = arith.subf %94, %97 : vector<4x4xf32>
    %99 = math.exp %98 : vector<4x4xf32>
    %cst_38 = arith.constant dense<0.000000e+00> : vector<4xf32>
    %100 = vector.multi_reduction <add>, %99, %cst_38 [1] : vector<4x4xf32> to vector<4xf32>
    %101 = vector.shape_cast %100 : vector<4xf32> to vector<4x1xf32>
    %102 = tpu.reciprocal %101 {approx = true} : vector<4x1xf32> -> vector<4x1xf32>
    %103 = vector.broadcast %102 : vector<4x1xf32> to vector<4x4xf32>
    %104 = arith.mulf %99, %103 : vector<4x4xf32>
    %105 = arith.truncf %104 : vector<4x4xf32> to vector<4x4xbf16>
    %cst_39 = arith.constant dense<0.000000e+00> : vector<4x8xf32>
    %106 = tpu.matmul %105, %93, %cst_39 {dimension_numbers = #tpu.dot_dimension_numbers<[1], [0], [0], [1], [0, 0, 1, 1], [], []>} : vector<4x4xbf16>, vector<4x8xbf16>, vector<4x8xf32> -> vector<4x8xf32>
    %107 = vector.extract_strided_slice %47 {offsets = [0, 24], sizes = [4, 8], strides = [1, 1]} : vector<4x32xf32> to vector<4x8xf32>
    %108 = arith.truncf %107 : vector<4x8xf32> to vector<4x8xbf16>
    %109 = vector.extract_strided_slice %48 {offsets = [0, 24], sizes = [4, 8], strides = [1, 1]} : vector<4x32xf32> to vector<4x8xf32>
    %110 = arith.truncf %109 : vector<4x8xf32> to vector<4x8xbf16>
    %111 = vector.extract_strided_slice %49 {offsets = [0, 24], sizes = [4, 8], strides = [1, 1]} : vector<4x32xf32> to vector<4x8xf32>
    %112 = arith.truncf %111 : vector<4x8xf32> to vector<4x8xbf16>
    %cst_40 = arith.constant dense<0.000000e+00> : vector<4x4xf32>
    %113 = tpu.matmul %108, %110, %cst_40 {dimension_numbers = #tpu.dot_dimension_numbers<[1], [1], [0], [0], [0, 0, 1, 0], [], []>} : vector<4x8xbf16>, vector<4x8xbf16>, vector<4x4xf32> -> vector<4x4xf32>
    %cst_41 = arith.constant dense<0xFF800000> : vector<4xf32>
    %114 = vector.multi_reduction <maximumf>, %113, %cst_41 [1] : vector<4x4xf32> to vector<4xf32>
    %115 = vector.shape_cast %114 : vector<4xf32> to vector<4x1xf32>
    %116 = vector.broadcast %115 : vector<4x1xf32> to vector<4x4xf32>
    %117 = arith.subf %113, %116 : vector<4x4xf32>
    %118 = math.exp %117 : vector<4x4xf32>
    %cst_42 = arith.constant dense<0.000000e+00> : vector<4xf32>
    %119 = vector.multi_reduction <add>, %118, %cst_42 [1] : vector<4x4xf32> to vector<4xf32>
    %120 = vector.shape_cast %119 : vector<4xf32> to vector<4x1xf32>
    %121 = tpu.reciprocal %120 {approx = true} : vector<4x1xf32> -> vector<4x1xf32>
    %122 = vector.broadcast %121 : vector<4x1xf32> to vector<4x4xf32>
    %123 = arith.mulf %118, %122 : vector<4x4xf32>
    %124 = arith.truncf %123 : vector<4x4xf32> to vector<4x4xbf16>
    %cst_43 = arith.constant dense<0.000000e+00> : vector<4x8xf32>
    %125 = tpu.matmul %124, %112, %cst_43 {dimension_numbers = #tpu.dot_dimension_numbers<[1], [0], [0], [1], [0, 0, 1, 1], [], []>} : vector<4x4xbf16>, vector<4x8xbf16>, vector<4x8xf32> -> vector<4x8xf32>
    %126 = tpu.concatenate %68, %87, %106, %125 in 1 : vector<4x8xf32>, vector<4x8xf32>, vector<4x8xf32>, vector<4x8xf32> -> vector<4x32xf32>
    %c0_44 = arith.constant 0 : index
    %c0_45 = arith.constant 0 : index
    %c0_46 = arith.constant 0 : index
    %127 = vector.load %arg9[%c0_44, %c0_45, %c0_46] : memref<2x32x32xbf16, #tpu.memory_space<vmem>>, vector<1x32x32xbf16>
    %128 = vector.shape_cast %127 : vector<1x32x32xbf16> to vector<32x32xbf16>
    %129 = arith.truncf %126 : vector<4x32xf32> to vector<4x32xbf16>
    %cst_47 = arith.constant dense<0.000000e+00> : vector<4x32xf32>
    %130 = tpu.matmul %129, %128, %cst_47 {dimension_numbers = #tpu.dot_dimension_numbers<[1], [0], [0], [1], [0, 0, 1, 1], [], []>} : vector<4x32xbf16>, vector<32x32xbf16>, vector<4x32xf32> -> vector<4x32xf32>
    %c0_48 = arith.constant 0 : index
    %c0_49 = arith.constant 0 : index
    %c0_50 = arith.constant 0 : index
    %131 = vector.load %arg10[%c0_48, %c0_49, %c0_50] : memref<2x1x32xf32, #tpu.memory_space<vmem>>, vector<1x1x32xf32>
    %132 = vector.shape_cast %131 : vector<1x1x32xf32> to vector<1x32xf32>
    %133 = vector.broadcast %132 : vector<1x32xf32> to vector<4x32xf32>
    %134 = arith.addf %130, %133 : vector<4x32xf32>
    %135 = arith.addf %10, %134 : vector<4x32xf32>
    %c0_51 = arith.constant 0 : index
    %c0_52 = arith.constant 0 : index
    %c0_53 = arith.constant 0 : index
    %136 = vector.load %arg11[%c0_51, %c0_52, %c0_53] : memref<2x1x32xf32, #tpu.memory_space<vmem>>, vector<1x1x32xf32>
    %137 = vector.shape_cast %136 : vector<1x1x32xf32> to vector<1x32xf32>
    %c0_54 = arith.constant 0 : index
    %c0_55 = arith.constant 0 : index
    %c0_56 = arith.constant 0 : index
    %138 = vector.load %arg12[%c0_54, %c0_55, %c0_56] : memref<2x1x32xf32, #tpu.memory_space<vmem>>, vector<1x1x32xf32>
    %139 = vector.shape_cast %138 : vector<1x1x32xf32> to vector<1x32xf32>
    %cst_57 = arith.constant dense<0.000000e+00> : vector<4xf32>
    %140 = vector.multi_reduction <add>, %135, %cst_57 [1] : vector<4x32xf32> to vector<4xf32>
    %141 = vector.shape_cast %140 : vector<4xf32> to vector<4x1xf32>
    %cst_58 = arith.constant 3.200000e+01 : f32
    %142 = vector.broadcast %cst_58 : f32 to vector<4x1xf32>
    %143 = arith.divf %141, %142 : vector<4x1xf32>
    %144 = vector.broadcast %143 : vector<4x1xf32> to vector<4x32xf32>
    %145 = arith.subf %135, %144 : vector<4x32xf32>
    %146 = arith.mulf %145, %145 : vector<4x32xf32>
    %cst_59 = arith.constant dense<0.000000e+00> : vector<4xf32>
    %147 = vector.multi_reduction <add>, %146, %cst_59 [1] : vector<4x32xf32> to vector<4xf32>
    %148 = vector.shape_cast %147 : vector<4xf32> to vector<4x1xf32>
    %cst_60 = arith.constant 3.200000e+01 : f32
    %149 = vector.broadcast %cst_60 : f32 to vector<4x1xf32>
    %150 = arith.divf %148, %149 : vector<4x1xf32>
    %151 = vector.broadcast %143 : vector<4x1xf32> to vector<4x32xf32>
    %152 = arith.subf %135, %151 : vector<4x32xf32>
    %cst_61 = arith.constant 9.99999997E-7 : f32
    %153 = vector.broadcast %cst_61 : f32 to vector<4x1xf32>
    %154 = arith.addf %150, %153 : vector<4x1xf32>
    %155 = math.rsqrt %154 : vector<4x1xf32>
    %156 = vector.broadcast %155 : vector<4x1xf32> to vector<4x32xf32>
    %157 = arith.mulf %152, %156 : vector<4x32xf32>
    %158 = vector.broadcast %137 : vector<1x32xf32> to vector<4x32xf32>
    %159 = arith.mulf %157, %158 : vector<4x32xf32>
    %160 = vector.broadcast %139 : vector<1x32xf32> to vector<4x32xf32>
    %161 = arith.addf %159, %160 : vector<4x32xf32>
    %c0_62 = arith.constant 0 : index
    %c0_63 = arith.constant 0 : index
    %c0_64 = arith.constant 0 : index
    %162 = vector.load %arg13[%c0_62, %c0_63, %c0_64] : memref<2x32x128xbf16, #tpu.memory_space<vmem>>, vector<1x32x128xbf16>
    %163 = vector.shape_cast %162 : vector<1x32x128xbf16> to vector<32x128xbf16>
    %164 = arith.truncf %161 : vector<4x32xf32> to vector<4x32xbf16>
    %cst_65 = arith.constant dense<0.000000e+00> : vector<4x128xf32>
    %165 = tpu.matmul %164, %163, %cst_65 {dimension_numbers = #tpu.dot_dimension_numbers<[1], [0], [0], [1], [0, 0, 1, 1], [], []>} : vector<4x32xbf16>, vector<32x128xbf16>, vector<4x128xf32> -> vector<4x128xf32>
    %c0_66 = arith.constant 0 : index
    %c0_67 = arith.constant 0 : index
    %c0_68 = arith.constant 0 : index
    %166 = vector.load %arg14[%c0_66, %c0_67, %c0_68] : memref<2x1x128xf32, #tpu.memory_space<vmem>>, vector<1x1x128xf32>
    %167 = vector.shape_cast %166 : vector<1x1x128xf32> to vector<1x128xf32>
    %168 = vector.broadcast %167 : vector<1x128xf32> to vector<4x128xf32>
    %169 = arith.addf %165, %168 : vector<4x128xf32>
    %170 = arith.mulf %169, %169 : vector<4x128xf32>
    %171 = arith.mulf %169, %170 : vector<4x128xf32>
    %cst_69 = arith.constant 4.471500e-02 : f32
    %172 = vector.broadcast %cst_69 : f32 to vector<4x128xf32>
    %173 = arith.mulf %172, %171 : vector<4x128xf32>
    %174 = arith.addf %169, %173 : vector<4x128xf32>
    %cst_70 = arith.constant 0.797884583 : f32
    %175 = vector.broadcast %cst_70 : f32 to vector<4x128xf32>
    %176 = arith.mulf %175, %174 : vector<4x128xf32>
    %177 = math.tanh %176 : vector<4x128xf32>
    %cst_71 = arith.constant 1.000000e+00 : f32
    %178 = vector.broadcast %cst_71 : f32 to vector<4x128xf32>
    %179 = arith.addf %178, %177 : vector<4x128xf32>
    %cst_72 = arith.constant 5.000000e-01 : f32
    %180 = vector.broadcast %cst_72 : f32 to vector<4x128xf32>
    %181 = arith.mulf %180, %179 : vector<4x128xf32>
    %182 = arith.mulf %169, %181 : vector<4x128xf32>
    %c0_73 = arith.constant 0 : index
    %c0_74 = arith.constant 0 : index
    %c0_75 = arith.constant 0 : index
    %183 = vector.load %arg15[%c0_73, %c0_74, %c0_75] : memref<2x128x32xbf16, #tpu.memory_space<vmem>>, vector<1x128x32xbf16>
    %184 = vector.shape_cast %183 : vector<1x128x32xbf16> to vector<128x32xbf16>
    %185 = arith.truncf %182 : vector<4x128xf32> to vector<4x128xbf16>
    %cst_76 = arith.constant dense<0.000000e+00> : vector<4x32xf32>
    %186 = tpu.matmul %185, %184, %cst_76 {dimension_numbers = #tpu.dot_dimension_numbers<[1], [0], [0], [1], [0, 0, 1, 1], [], []>} : vector<4x128xbf16>, vector<128x32xbf16>, vector<4x32xf32> -> vector<4x32xf32>
    %c0_77 = arith.constant 0 : index
    %c0_78 = arith.constant 0 : index
    %c0_79 = arith.constant 0 : index
    %187 = vector.load %arg16[%c0_77, %c0_78, %c0_79] : memref<2x1x32xf32, #tpu.memory_space<vmem>>, vector<1x1x32xf32>
    %188 = vector.shape_cast %187 : vector<1x1x32xf32> to vector<1x32xf32>
    %189 = vector.broadcast %188 : vector<1x32xf32> to vector<4x32xf32>
    %190 = arith.addf %186, %189 : vector<4x32xf32>
    %191 = arith.addf %135, %190 : vector<4x32xf32>
    %c1 = arith.constant 1 : index
    %c0_80 = arith.constant 0 : index
    %c0_81 = arith.constant 0 : index
    %192 = vector.load %arg5[%c1, %c0_80, %c0_81] : memref<2x1x32xf32, #tpu.memory_space<vmem>>, vector<1x1x32xf32>
    %193 = vector.shape_cast %192 : vector<1x1x32xf32> to vector<1x32xf32>
    %c1_82 = arith.constant 1 : index
    %c0_83 = arith.constant 0 : index
    %c0_84 = arith.constant 0 : index
    %194 = vector.load %arg6[%c1_82, %c0_83, %c0_84] : memref<2x1x32xf32, #tpu.memory_space<vmem>>, vector<1x1x32xf32>
    %195 = vector.shape_cast %194 : vector<1x1x32xf32> to vector<1x32xf32>
    %cst_85 = arith.constant dense<0.000000e+00> : vector<4xf32>
    %196 = vector.multi_reduction <add>, %191, %cst_85 [1] : vector<4x32xf32> to vector<4xf32>
    %197 = vector.shape_cast %196 : vector<4xf32> to vector<4x1xf32>
    %cst_86 = arith.constant 3.200000e+01 : f32
    %198 = vector.broadcast %cst_86 : f32 to vector<4x1xf32>
    %199 = arith.divf %197, %198 : vector<4x1xf32>
    %200 = vector.broadcast %199 : vector<4x1xf32> to vector<4x32xf32>
    %201 = arith.subf %191, %200 : vector<4x32xf32>
    %202 = arith.mulf %201, %201 : vector<4x32xf32>
    %cst_87 = arith.constant dense<0.000000e+00> : vector<4xf32>
    %203 = vector.multi_reduction <add>, %202, %cst_87 [1] : vector<4x32xf32> to vector<4xf32>
    %204 = vector.shape_cast %203 : vector<4xf32> to vector<4x1xf32>
    %cst_88 = arith.constant 3.200000e+01 : f32
    %205 = vector.broadcast %cst_88 : f32 to vector<4x1xf32>
    %206 = arith.divf %204, %205 : vector<4x1xf32>
    %207 = vector.broadcast %199 : vector<4x1xf32> to vector<4x32xf32>
    %208 = arith.subf %191, %207 : vector<4x32xf32>
    %cst_89 = arith.constant 9.99999997E-7 : f32
    %209 = vector.broadcast %cst_89 : f32 to vector<4x1xf32>
    %210 = arith.addf %206, %209 : vector<4x1xf32>
    %211 = math.rsqrt %210 : vector<4x1xf32>
    %212 = vector.broadcast %211 : vector<4x1xf32> to vector<4x32xf32>
    %213 = arith.mulf %208, %212 : vector<4x32xf32>
    %214 = vector.broadcast %193 : vector<1x32xf32> to vector<4x32xf32>
    %215 = arith.mulf %213, %214 : vector<4x32xf32>
    %216 = vector.broadcast %195 : vector<1x32xf32> to vector<4x32xf32>
    %217 = arith.addf %215, %216 : vector<4x32xf32>
    %c1_90 = arith.constant 1 : index
    %c0_91 = arith.constant 0 : index
    %c0_92 = arith.constant 0 : index
    %218 = vector.load %arg7[%c1_90, %c0_91, %c0_92] : memref<2x32x96xbf16, #tpu.memory_space<vmem>>, vector<1x32x96xbf16>
    %219 = vector.shape_cast %218 : vector<1x32x96xbf16> to vector<32x96xbf16>
    %220 = arith.truncf %217 : vector<4x32xf32> to vector<4x32xbf16>
    %cst_93 = arith.constant dense<0.000000e+00> : vector<4x96xf32>
    %221 = tpu.matmul %220, %219, %cst_93 {dimension_numbers = #tpu.dot_dimension_numbers<[1], [0], [0], [1], [0, 0, 1, 1], [], []>} : vector<4x32xbf16>, vector<32x96xbf16>, vector<4x96xf32> -> vector<4x96xf32>
    %c1_94 = arith.constant 1 : index
    %c0_95 = arith.constant 0 : index
    %c0_96 = arith.constant 0 : index
    %222 = vector.load %arg8[%c1_94, %c0_95, %c0_96] : memref<2x1x96xf32, #tpu.memory_space<vmem>>, vector<1x1x96xf32>
    %223 = vector.shape_cast %222 : vector<1x1x96xf32> to vector<1x96xf32>
    %224 = vector.broadcast %223 : vector<1x96xf32> to vector<4x96xf32>
    %225 = arith.addf %221, %224 : vector<4x96xf32>
    %226 = vector.extract_strided_slice %225 {offsets = [0, 0], sizes = [4, 32], strides = [1, 1]} : vector<4x96xf32> to vector<4x32xf32>
    %cst_97 = arith.constant 0.353553385 : f32
    %227 = vector.broadcast %cst_97 : f32 to vector<4x32xf32>
    %228 = arith.mulf %226, %227 : vector<4x32xf32>
    %229 = vector.extract_strided_slice %225 {offsets = [0, 32], sizes = [4, 32], strides = [1, 1]} : vector<4x96xf32> to vector<4x32xf32>
    %230 = vector.extract_strided_slice %225 {offsets = [0, 64], sizes = [4, 32], strides = [1, 1]} : vector<4x96xf32> to vector<4x32xf32>
    %231 = vector.extract_strided_slice %228 {offsets = [0, 0], sizes = [4, 8], strides = [1, 1]} : vector<4x32xf32> to vector<4x8xf32>
    %232 = arith.truncf %231 : vector<4x8xf32> to vector<4x8xbf16>
    %233 = vector.extract_strided_slice %229 {offsets = [0, 0], sizes = [4, 8], strides = [1, 1]} : vector<4x32xf32> to vector<4x8xf32>
    %234 = arith.truncf %233 : vector<4x8xf32> to vector<4x8xbf16>
    %235 = vector.extract_strided_slice %230 {offsets = [0, 0], sizes = [4, 8], strides = [1, 1]} : vector<4x32xf32> to vector<4x8xf32>
    %236 = arith.truncf %235 : vector<4x8xf32> to vector<4x8xbf16>
    %cst_98 = arith.constant dense<0.000000e+00> : vector<4x4xf32>
    %237 = tpu.matmul %232, %234, %cst_98 {dimension_numbers = #tpu.dot_dimension_numbers<[1], [1], [0], [0], [0, 0, 1, 0], [], []>} : vector<4x8xbf16>, vector<4x8xbf16>, vector<4x4xf32> -> vector<4x4xf32>
    %cst_99 = arith.constant dense<0xFF800000> : vector<4xf32>
    %238 = vector.multi_reduction <maximumf>, %237, %cst_99 [1] : vector<4x4xf32> to vector<4xf32>
    %239 = vector.shape_cast %238 : vector<4xf32> to vector<4x1xf32>
    %240 = vector.broadcast %239 : vector<4x1xf32> to vector<4x4xf32>
    %241 = arith.subf %237, %240 : vector<4x4xf32>
    %242 = math.exp %241 : vector<4x4xf32>
    %cst_100 = arith.constant dense<0.000000e+00> : vector<4xf32>
    %243 = vector.multi_reduction <add>, %242, %cst_100 [1] : vector<4x4xf32> to vector<4xf32>
    %244 = vector.shape_cast %243 : vector<4xf32> to vector<4x1xf32>
    %245 = tpu.reciprocal %244 {approx = true} : vector<4x1xf32> -> vector<4x1xf32>
    %246 = vector.broadcast %245 : vector<4x1xf32> to vector<4x4xf32>
    %247 = arith.mulf %242, %246 : vector<4x4xf32>
    %248 = arith.truncf %247 : vector<4x4xf32> to vector<4x4xbf16>
    %cst_101 = arith.constant dense<0.000000e+00> : vector<4x8xf32>
    %249 = tpu.matmul %248, %236, %cst_101 {dimension_numbers = #tpu.dot_dimension_numbers<[1], [0], [0], [1], [0, 0, 1, 1], [], []>} : vector<4x4xbf16>, vector<4x8xbf16>, vector<4x8xf32> -> vector<4x8xf32>
    %250 = vector.extract_strided_slice %228 {offsets = [0, 8], sizes = [4, 8], strides = [1, 1]} : vector<4x32xf32> to vector<4x8xf32>
    %251 = arith.truncf %250 : vector<4x8xf32> to vector<4x8xbf16>
    %252 = vector.extract_strided_slice %229 {offsets = [0, 8], sizes = [4, 8], strides = [1, 1]} : vector<4x32xf32> to vector<4x8xf32>
    %253 = arith.truncf %252 : vector<4x8xf32> to vector<4x8xbf16>
    %254 = vector.extract_strided_slice %230 {offsets = [0, 8], sizes = [4, 8], strides = [1, 1]} : vector<4x32xf32> to vector<4x8xf32>
    %255 = arith.truncf %254 : vector<4x8xf32> to vector<4x8xbf16>
    %cst_102 = arith.constant dense<0.000000e+00> : vector<4x4xf32>
    %256 = tpu.matmul %251, %253, %cst_102 {dimension_numbers = #tpu.dot_dimension_numbers<[1], [1], [0], [0], [0, 0, 1, 0], [], []>} : vector<4x8xbf16>, vector<4x8xbf16>, vector<4x4xf32> -> vector<4x4xf32>
    %cst_103 = arith.constant dense<0xFF800000> : vector<4xf32>
    %257 = vector.multi_reduction <maximumf>, %256, %cst_103 [1] : vector<4x4xf32> to vector<4xf32>
    %258 = vector.shape_cast %257 : vector<4xf32> to vector<4x1xf32>
    %259 = vector.broadcast %258 : vector<4x1xf32> to vector<4x4xf32>
    %260 = arith.subf %256, %259 : vector<4x4xf32>
    %261 = math.exp %260 : vector<4x4xf32>
    %cst_104 = arith.constant dense<0.000000e+00> : vector<4xf32>
    %262 = vector.multi_reduction <add>, %261, %cst_104 [1] : vector<4x4xf32> to vector<4xf32>
    %263 = vector.shape_cast %262 : vector<4xf32> to vector<4x1xf32>
    %264 = tpu.reciprocal %263 {approx = true} : vector<4x1xf32> -> vector<4x1xf32>
    %265 = vector.broadcast %264 : vector<4x1xf32> to vector<4x4xf32>
    %266 = arith.mulf %261, %265 : vector<4x4xf32>
    %267 = arith.truncf %266 : vector<4x4xf32> to vector<4x4xbf16>
    %cst_105 = arith.constant dense<0.000000e+00> : vector<4x8xf32>
    %268 = tpu.matmul %267, %255, %cst_105 {dimension_numbers = #tpu.dot_dimension_numbers<[1], [0], [0], [1], [0, 0, 1, 1], [], []>} : vector<4x4xbf16>, vector<4x8xbf16>, vector<4x8xf32> -> vector<4x8xf32>
    %269 = vector.extract_strided_slice %228 {offsets = [0, 16], sizes = [4, 8], strides = [1, 1]} : vector<4x32xf32> to vector<4x8xf32>
    %270 = arith.truncf %269 : vector<4x8xf32> to vector<4x8xbf16>
    %271 = vector.extract_strided_slice %229 {offsets = [0, 16], sizes = [4, 8], strides = [1, 1]} : vector<4x32xf32> to vector<4x8xf32>
    %272 = arith.truncf %271 : vector<4x8xf32> to vector<4x8xbf16>
    %273 = vector.extract_strided_slice %230 {offsets = [0, 16], sizes = [4, 8], strides = [1, 1]} : vector<4x32xf32> to vector<4x8xf32>
    %274 = arith.truncf %273 : vector<4x8xf32> to vector<4x8xbf16>
    %cst_106 = arith.constant dense<0.000000e+00> : vector<4x4xf32>
    %275 = tpu.matmul %270, %272, %cst_106 {dimension_numbers = #tpu.dot_dimension_numbers<[1], [1], [0], [0], [0, 0, 1, 0], [], []>} : vector<4x8xbf16>, vector<4x8xbf16>, vector<4x4xf32> -> vector<4x4xf32>
    %cst_107 = arith.constant dense<0xFF800000> : vector<4xf32>
    %276 = vector.multi_reduction <maximumf>, %275, %cst_107 [1] : vector<4x4xf32> to vector<4xf32>
    %277 = vector.shape_cast %276 : vector<4xf32> to vector<4x1xf32>
    %278 = vector.broadcast %277 : vector<4x1xf32> to vector<4x4xf32>
    %279 = arith.subf %275, %278 : vector<4x4xf32>
    %280 = math.exp %279 : vector<4x4xf32>
    %cst_108 = arith.constant dense<0.000000e+00> : vector<4xf32>
    %281 = vector.multi_reduction <add>, %280, %cst_108 [1] : vector<4x4xf32> to vector<4xf32>
    %282 = vector.shape_cast %281 : vector<4xf32> to vector<4x1xf32>
    %283 = tpu.reciprocal %282 {approx = true} : vector<4x1xf32> -> vector<4x1xf32>
    %284 = vector.broadcast %283 : vector<4x1xf32> to vector<4x4xf32>
    %285 = arith.mulf %280, %284 : vector<4x4xf32>
    %286 = arith.truncf %285 : vector<4x4xf32> to vector<4x4xbf16>
    %cst_109 = arith.constant dense<0.000000e+00> : vector<4x8xf32>
    %287 = tpu.matmul %286, %274, %cst_109 {dimension_numbers = #tpu.dot_dimension_numbers<[1], [0], [0], [1], [0, 0, 1, 1], [], []>} : vector<4x4xbf16>, vector<4x8xbf16>, vector<4x8xf32> -> vector<4x8xf32>
    %288 = vector.extract_strided_slice %228 {offsets = [0, 24], sizes = [4, 8], strides = [1, 1]} : vector<4x32xf32> to vector<4x8xf32>
    %289 = arith.truncf %288 : vector<4x8xf32> to vector<4x8xbf16>
    %290 = vector.extract_strided_slice %229 {offsets = [0, 24], sizes = [4, 8], strides = [1, 1]} : vector<4x32xf32> to vector<4x8xf32>
    %291 = arith.truncf %290 : vector<4x8xf32> to vector<4x8xbf16>
    %292 = vector.extract_strided_slice %230 {offsets = [0, 24], sizes = [4, 8], strides = [1, 1]} : vector<4x32xf32> to vector<4x8xf32>
    %293 = arith.truncf %292 : vector<4x8xf32> to vector<4x8xbf16>
    %cst_110 = arith.constant dense<0.000000e+00> : vector<4x4xf32>
    %294 = tpu.matmul %289, %291, %cst_110 {dimension_numbers = #tpu.dot_dimension_numbers<[1], [1], [0], [0], [0, 0, 1, 0], [], []>} : vector<4x8xbf16>, vector<4x8xbf16>, vector<4x4xf32> -> vector<4x4xf32>
    %cst_111 = arith.constant dense<0xFF800000> : vector<4xf32>
    %295 = vector.multi_reduction <maximumf>, %294, %cst_111 [1] : vector<4x4xf32> to vector<4xf32>
    %296 = vector.shape_cast %295 : vector<4xf32> to vector<4x1xf32>
    %297 = vector.broadcast %296 : vector<4x1xf32> to vector<4x4xf32>
    %298 = arith.subf %294, %297 : vector<4x4xf32>
    %299 = math.exp %298 : vector<4x4xf32>
    %cst_112 = arith.constant dense<0.000000e+00> : vector<4xf32>
    %300 = vector.multi_reduction <add>, %299, %cst_112 [1] : vector<4x4xf32> to vector<4xf32>
    %301 = vector.shape_cast %300 : vector<4xf32> to vector<4x1xf32>
    %302 = tpu.reciprocal %301 {approx = true} : vector<4x1xf32> -> vector<4x1xf32>
    %303 = vector.broadcast %302 : vector<4x1xf32> to vector<4x4xf32>
    %304 = arith.mulf %299, %303 : vector<4x4xf32>
    %305 = arith.truncf %304 : vector<4x4xf32> to vector<4x4xbf16>
    %cst_113 = arith.constant dense<0.000000e+00> : vector<4x8xf32>
    %306 = tpu.matmul %305, %293, %cst_113 {dimension_numbers = #tpu.dot_dimension_numbers<[1], [0], [0], [1], [0, 0, 1, 1], [], []>} : vector<4x4xbf16>, vector<4x8xbf16>, vector<4x8xf32> -> vector<4x8xf32>
    %307 = tpu.concatenate %249, %268, %287, %306 in 1 : vector<4x8xf32>, vector<4x8xf32>, vector<4x8xf32>, vector<4x8xf32> -> vector<4x32xf32>
    %c1_114 = arith.constant 1 : index
    %c0_115 = arith.constant 0 : index
    %c0_116 = arith.constant 0 : index
    %308 = vector.load %arg9[%c1_114, %c0_115, %c0_116] : memref<2x32x32xbf16, #tpu.memory_space<vmem>>, vector<1x32x32xbf16>
    %309 = vector.shape_cast %308 : vector<1x32x32xbf16> to vector<32x32xbf16>
    %310 = arith.truncf %307 : vector<4x32xf32> to vector<4x32xbf16>
    %cst_117 = arith.constant dense<0.000000e+00> : vector<4x32xf32>
    %311 = tpu.matmul %310, %309, %cst_117 {dimension_numbers = #tpu.dot_dimension_numbers<[1], [0], [0], [1], [0, 0, 1, 1], [], []>} : vector<4x32xbf16>, vector<32x32xbf16>, vector<4x32xf32> -> vector<4x32xf32>
    %c1_118 = arith.constant 1 : index
    %c0_119 = arith.constant 0 : index
    %c0_120 = arith.constant 0 : index
    %312 = vector.load %arg10[%c1_118, %c0_119, %c0_120] : memref<2x1x32xf32, #tpu.memory_space<vmem>>, vector<1x1x32xf32>
    %313 = vector.shape_cast %312 : vector<1x1x32xf32> to vector<1x32xf32>
    %314 = vector.broadcast %313 : vector<1x32xf32> to vector<4x32xf32>
    %315 = arith.addf %311, %314 : vector<4x32xf32>
    %316 = arith.addf %191, %315 : vector<4x32xf32>
    %c1_121 = arith.constant 1 : index
    %c0_122 = arith.constant 0 : index
    %c0_123 = arith.constant 0 : index
    %317 = vector.load %arg11[%c1_121, %c0_122, %c0_123] : memref<2x1x32xf32, #tpu.memory_space<vmem>>, vector<1x1x32xf32>
    %318 = vector.shape_cast %317 : vector<1x1x32xf32> to vector<1x32xf32>
    %c1_124 = arith.constant 1 : index
    %c0_125 = arith.constant 0 : index
    %c0_126 = arith.constant 0 : index
    %319 = vector.load %arg12[%c1_124, %c0_125, %c0_126] : memref<2x1x32xf32, #tpu.memory_space<vmem>>, vector<1x1x32xf32>
    %320 = vector.shape_cast %319 : vector<1x1x32xf32> to vector<1x32xf32>
    %cst_127 = arith.constant dense<0.000000e+00> : vector<4xf32>
    %321 = vector.multi_reduction <add>, %316, %cst_127 [1] : vector<4x32xf32> to vector<4xf32>
    %322 = vector.shape_cast %321 : vector<4xf32> to vector<4x1xf32>
    %cst_128 = arith.constant 3.200000e+01 : f32
    %323 = vector.broadcast %cst_128 : f32 to vector<4x1xf32>
    %324 = arith.divf %322, %323 : vector<4x1xf32>
    %325 = vector.broadcast %324 : vector<4x1xf32> to vector<4x32xf32>
    %326 = arith.subf %316, %325 : vector<4x32xf32>
    %327 = arith.mulf %326, %326 : vector<4x32xf32>
    %cst_129 = arith.constant dense<0.000000e+00> : vector<4xf32>
    %328 = vector.multi_reduction <add>, %327, %cst_129 [1] : vector<4x32xf32> to vector<4xf32>
    %329 = vector.shape_cast %328 : vector<4xf32> to vector<4x1xf32>
    %cst_130 = arith.constant 3.200000e+01 : f32
    %330 = vector.broadcast %cst_130 : f32 to vector<4x1xf32>
    %331 = arith.divf %329, %330 : vector<4x1xf32>
    %332 = vector.broadcast %324 : vector<4x1xf32> to vector<4x32xf32>
    %333 = arith.subf %316, %332 : vector<4x32xf32>
    %cst_131 = arith.constant 9.99999997E-7 : f32
    %334 = vector.broadcast %cst_131 : f32 to vector<4x1xf32>
    %335 = arith.addf %331, %334 : vector<4x1xf32>
    %336 = math.rsqrt %335 : vector<4x1xf32>
    %337 = vector.broadcast %336 : vector<4x1xf32> to vector<4x32xf32>
    %338 = arith.mulf %333, %337 : vector<4x32xf32>
    %339 = vector.broadcast %318 : vector<1x32xf32> to vector<4x32xf32>
    %340 = arith.mulf %338, %339 : vector<4x32xf32>
    %341 = vector.broadcast %320 : vector<1x32xf32> to vector<4x32xf32>
    %342 = arith.addf %340, %341 : vector<4x32xf32>
    %c1_132 = arith.constant 1 : index
    %c0_133 = arith.constant 0 : index
    %c0_134 = arith.constant 0 : index
    %343 = vector.load %arg13[%c1_132, %c0_133, %c0_134] : memref<2x32x128xbf16, #tpu.memory_space<vmem>>, vector<1x32x128xbf16>
    %344 = vector.shape_cast %343 : vector<1x32x128xbf16> to vector<32x128xbf16>
    %345 = arith.truncf %342 : vector<4x32xf32> to vector<4x32xbf16>
    %cst_135 = arith.constant dense<0.000000e+00> : vector<4x128xf32>
    %346 = tpu.matmul %345, %344, %cst_135 {dimension_numbers = #tpu.dot_dimension_numbers<[1], [0], [0], [1], [0, 0, 1, 1], [], []>} : vector<4x32xbf16>, vector<32x128xbf16>, vector<4x128xf32> -> vector<4x128xf32>
    %c1_136 = arith.constant 1 : index
    %c0_137 = arith.constant 0 : index
    %c0_138 = arith.constant 0 : index
    %347 = vector.load %arg14[%c1_136, %c0_137, %c0_138] : memref<2x1x128xf32, #tpu.memory_space<vmem>>, vector<1x1x128xf32>
    %348 = vector.shape_cast %347 : vector<1x1x128xf32> to vector<1x128xf32>
    %349 = vector.broadcast %348 : vector<1x128xf32> to vector<4x128xf32>
    %350 = arith.addf %346, %349 : vector<4x128xf32>
    %351 = arith.mulf %350, %350 : vector<4x128xf32>
    %352 = arith.mulf %350, %351 : vector<4x128xf32>
    %cst_139 = arith.constant 4.471500e-02 : f32
    %353 = vector.broadcast %cst_139 : f32 to vector<4x128xf32>
    %354 = arith.mulf %353, %352 : vector<4x128xf32>
    %355 = arith.addf %350, %354 : vector<4x128xf32>
    %cst_140 = arith.constant 0.797884583 : f32
    %356 = vector.broadcast %cst_140 : f32 to vector<4x128xf32>
    %357 = arith.mulf %356, %355 : vector<4x128xf32>
    %358 = math.tanh %357 : vector<4x128xf32>
    %cst_141 = arith.constant 1.000000e+00 : f32
    %359 = vector.broadcast %cst_141 : f32 to vector<4x128xf32>
    %360 = arith.addf %359, %358 : vector<4x128xf32>
    %cst_142 = arith.constant 5.000000e-01 : f32
    %361 = vector.broadcast %cst_142 : f32 to vector<4x128xf32>
    %362 = arith.mulf %361, %360 : vector<4x128xf32>
    %363 = arith.mulf %350, %362 : vector<4x128xf32>
    %c1_143 = arith.constant 1 : index
    %c0_144 = arith.constant 0 : index
    %c0_145 = arith.constant 0 : index
    %364 = vector.load %arg15[%c1_143, %c0_144, %c0_145] : memref<2x128x32xbf16, #tpu.memory_space<vmem>>, vector<1x128x32xbf16>
    %365 = vector.shape_cast %364 : vector<1x128x32xbf16> to vector<128x32xbf16>
    %366 = arith.truncf %363 : vector<4x128xf32> to vector<4x128xbf16>
    %cst_146 = arith.constant dense<0.000000e+00> : vector<4x32xf32>
    %367 = tpu.matmul %366, %365, %cst_146 {dimension_numbers = #tpu.dot_dimension_numbers<[1], [0], [0], [1], [0, 0, 1, 1], [], []>} : vector<4x128xbf16>, vector<128x32xbf16>, vector<4x32xf32> -> vector<4x32xf32>
    %c1_147 = arith.constant 1 : index
    %c0_148 = arith.constant 0 : index
    %c0_149 = arith.constant 0 : index
    %368 = vector.load %arg16[%c1_147, %c0_148, %c0_149] : memref<2x1x32xf32, #tpu.memory_space<vmem>>, vector<1x1x32xf32>
    %369 = vector.shape_cast %368 : vector<1x1x32xf32> to vector<1x32xf32>
    %370 = vector.broadcast %369 : vector<1x32xf32> to vector<4x32xf32>
    %371 = arith.addf %367, %370 : vector<4x32xf32>
    %372 = arith.addf %316, %371 : vector<4x32xf32>
    %c0_150 = arith.constant 0 : index
    %c0_151 = arith.constant 0 : index
    %373 = vector.load %arg17[%c0_150, %c0_151] : memref<1x32xf32, #tpu.memory_space<vmem>>, vector<1x32xf32>
    %c0_152 = arith.constant 0 : index
    %c0_153 = arith.constant 0 : index
    %374 = vector.load %arg18[%c0_152, %c0_153] : memref<1x32xf32, #tpu.memory_space<vmem>>, vector<1x32xf32>
    %cst_154 = arith.constant dense<0.000000e+00> : vector<4xf32>
    %375 = vector.multi_reduction <add>, %372, %cst_154 [1] : vector<4x32xf32> to vector<4xf32>
    %376 = vector.shape_cast %375 : vector<4xf32> to vector<4x1xf32>
    %cst_155 = arith.constant 3.200000e+01 : f32
    %377 = vector.broadcast %cst_155 : f32 to vector<4x1xf32>
    %378 = arith.divf %376, %377 : vector<4x1xf32>
    %379 = vector.broadcast %378 : vector<4x1xf32> to vector<4x32xf32>
    %380 = arith.subf %372, %379 : vector<4x32xf32>
    %381 = arith.mulf %380, %380 : vector<4x32xf32>
    %cst_156 = arith.constant dense<0.000000e+00> : vector<4xf32>
    %382 = vector.multi_reduction <add>, %381, %cst_156 [1] : vector<4x32xf32> to vector<4xf32>
    %383 = vector.shape_cast %382 : vector<4xf32> to vector<4x1xf32>
    %cst_157 = arith.constant 3.200000e+01 : f32
    %384 = vector.broadcast %cst_157 : f32 to vector<4x1xf32>
    %385 = arith.divf %383, %384 : vector<4x1xf32>
    %386 = vector.broadcast %378 : vector<4x1xf32> to vector<4x32xf32>
    %387 = arith.subf %372, %386 : vector<4x32xf32>
    %cst_158 = arith.constant 9.99999997E-7 : f32
    %388 = vector.broadcast %cst_158 : f32 to vector<4x1xf32>
    %389 = arith.addf %385, %388 : vector<4x1xf32>
    %390 = math.rsqrt %389 : vector<4x1xf32>
    %391 = vector.broadcast %390 : vector<4x1xf32> to vector<4x32xf32>
    %392 = arith.mulf %387, %391 : vector<4x32xf32>
    %393 = vector.broadcast %373 : vector<1x32xf32> to vector<4x32xf32>
    %394 = arith.mulf %392, %393 : vector<4x32xf32>
    %395 = vector.broadcast %374 : vector<1x32xf32> to vector<4x32xf32>
    %396 = arith.addf %394, %395 : vector<4x32xf32>
    %c0_159 = arith.constant 0 : index
    %c0_160 = arith.constant 0 : index
    %c0_161 = arith.constant 0 : index
    %397 = vector.load %arg19[%c0_159, %c0_160, %c0_161] : memref<1x4x32xf32, #tpu.memory_space<vmem>>, vector<1x4x32xf32>
    %398 = vector.shape_cast %397 : vector<1x4x32xf32> to vector<4x32xf32>
    %399 = vector.shape_cast %396 : vector<4x32xf32> to vector<1x4x32xf32>
    tpu.vector_store %arg19[%c0_159, %c0_160, %c0_161], %399 {strides = array<i32>} : memref<1x4x32xf32, #tpu.memory_space<vmem>>, vector<1x4x32xf32>,
    return
  }
  func.func @transform_0(%arg0: i32) -> (i32, i32, i32) {
    %c0_i32 = arith.constant 0 : i32
    %c0_i32_0 = arith.constant 0 : i32
    %c0_i32_1 = arith.constant 0 : i32
    return %arg0, %c0_i32, %c0_i32_0 : i32, i32, i32
  }
  func.func @transform_1(%arg0: i32) -> (i32, i32) {
    %c0_i32 = arith.constant 0 : i32
    %c0_i32_0 = arith.constant 0 : i32
    %c0_i32_1 = arith.constant 0 : i32
    return %c0_i32, %c0_i32_0 : i32, i32
  }
  func.func @transform_2(%arg0: i32) -> (i32, i32) {
    %c0_i32 = arith.constant 0 : i32
    %c0_i32_0 = arith.constant 0 : i32
    %c0_i32_1 = arith.constant 0 : i32
    return %c0_i32, %c0_i32_0 : i32, i32
  }
  func.func @transform_3(%arg0: i32) -> (i32, i32, i32) {
    %c0_i32 = arith.constant 0 : i32
    %c0_i32_0 = arith.constant 0 : i32
    %c0_i32_1 = arith.constant 0 : i32
    %c0_i32_2 = arith.constant 0 : i32
    return %c0_i32, %c0_i32_0, %c0_i32_1 : i32, i32, i32
  }
  func.func @transform_4(%arg0: i32) -> (i32, i32, i32) {
    %c0_i32 = arith.constant 0 : i32
    %c0_i32_0 = arith.constant 0 : i32
    %c0_i32_1 = arith.constant 0 : i32
    %c0_i32_2 = arith.constant 0 : i32
    return %c0_i32, %c0_i32_0, %c0_i32_1 : i32, i32, i32
  }
  func.func @transform_5(%arg0: i32) -> (i32, i32, i32) {
    %c0_i32 = arith.constant 0 : i32
    %c0_i32_0 = arith.constant 0 : i32
    %c0_i32_1 = arith.constant 0 : i32
    %c0_i32_2 = arith.constant 0 : i32
    return %c0_i32, %c0_i32_0, %c0_i32_1 : i32, i32, i32
  }
  func.func @transform_6(%arg0: i32) -> (i32, i32, i32) {
    %c0_i32 = arith.constant 0 : i32
    %c0_i32_0 = arith.constant 0 : i32
    %c0_i32_1 = arith.constant 0 : i32
    %c0_i32_2 = arith.constant 0 : i32
    return %c0_i32, %c0_i32_0, %c0_i32_1 : i32, i32, i32
  }
  func.func @transform_7(%arg0: i32) -> (i32, i32, i32) {
    %c0_i32 = arith.constant 0 : i32
    %c0_i32_0 = arith.constant 0 : i32
    %c0_i32_1 = arith.constant 0 : i32
    %c0_i32_2 = arith.constant 0 : i32
    return %c0_i32, %c0_i32_0, %c0_i32_1 : i32, i32, i32
  }
  func.func @transform_8(%arg0: i32) -> (i32, i32, i32) {
    %c0_i32 = arith.constant 0 : i32
    %c0_i32_0 = arith.constant 0 : i32
    %c0_i32_1 = arith.constant 0 : i32
    %c0_i32_2 = arith.constant 0 : i32
    return %c0_i32, %c0_i32_0, %c0_i32_1 : i32, i32, i32
  }
  func.func @transform_9(%arg0: i32) -> (i32, i32, i32) {
    %c0_i32 = arith.constant 0 : i32
    %c0_i32_0 = arith.constant 0 : i32
    %c0_i32_1 = arith.constant 0 : i32
    %c0_i32_2 = arith.constant 0 : i32
    return %c0_i32, %c0_i32_0, %c0_i32_1 : i32, i32, i32
  }
  func.func @transform_10(%arg0: i32) -> (i32, i32, i32) {
    %c0_i32 = arith.constant 0 : i32
    %c0_i32_0 = arith.constant 0 : i32
    %c0_i32_1 = arith.constant 0 : i32
    %c0_i32_2 = arith.constant 0 : i32
    return %c0_i32, %c0_i32_0, %c0_i32_1 : i32, i32, i32
  }
  func.func @transform_11(%arg0: i32) -> (i32, i32, i32) {
    %c0_i32 = arith.constant 0 : i32
    %c0_i32_0 = arith.constant 0 : i32
    %c0_i32_1 = arith.constant 0 : i32
    %c0_i32_2 = arith.constant 0 : i32
    return %c0_i32, %c0_i32_0, %c0_i32_1 : i32, i32, i32
  }
  func.func @transform_12(%arg0: i32) -> (i32, i32, i32) {
    %c0_i32 = arith.constant 0 : i32
    %c0_i32_0 = arith.constant 0 : i32
    %c0_i32_1 = arith.constant 0 : i32
    %c0_i32_2 = arith.constant 0 : i32
    return %c0_i32, %c0_i32_0, %c0_i32_1 : i32, i32, i32
  }
  func.func @transform_13(%arg0: i32) -> (i32, i32, i32) {
    %c0_i32 = arith.constant 0 : i32
    %c0_i32_0 = arith.constant 0 : i32
    %c0_i32_1 = arith.constant 0 : i32
    %c0_i32_2 = arith.constant 0 : i32
    return %c0_i32, %c0_i32_0, %c0_i32_1 : i32, i32, i32
  }
  func.func @transform_14(%arg0: i32) -> (i32, i32, i32) {
    %c0_i32 = arith.constant 0 : i32
    %c0_i32_0 = arith.constant 0 : i32
    %c0_i32_1 = arith.constant 0 : i32
    %c0_i32_2 = arith.constant 0 : i32
    return %c0_i32, %c0_i32_0, %c0_i32_1 : i32, i32, i32
  }
  func.func @transform_15(%arg0: i32) -> (i32, i32, i32) {
    %c0_i32 = arith.constant 0 : i32
    %c0_i32_0 = arith.constant 0 : i32
    %c0_i32_1 = arith.constant 0 : i32
    %c0_i32_2 = arith.constant 0 : i32
    return %c0_i32, %c0_i32_0, %c0_i32_1 : i32, i32, i32
  }
  func.func @transform_16(%arg0: i32) -> (i32, i32) {
    %c0_i32 = arith.constant 0 : i32
    %c0_i32_0 = arith.constant 0 : i32
    %c0_i32_1 = arith.constant 0 : i32
    return %c0_i32, %c0_i32_0 : i32, i32
  }
  func.func @transform_17(%arg0: i32) -> (i32, i32) {
    %c0_i32 = arith.constant 0 : i32
    %c0_i32_0 = arith.constant 0 : i32
    %c0_i32_1 = arith.constant 0 : i32
    return %c0_i32, %c0_i32_0 : i32, i32
  }
  func.func @transform_18(%arg0: i32) -> (i32, i32, i32) {
    %c0_i32 = arith.constant 0 : i32
    %c0_i32_0 = arith.constant 0 : i32
    %c0_i32_1 = arith.constant 0 : i32
    return %arg0, %c0_i32, %c0_i32_0 : i32, i32, i32
  }
}

</mosaic_0001>

<llo_original>
// kernel: upstream_expert_forward.1
$region0: #{upstream_expert_forward.1}
  #allocation0 [shape = 'u32[]', space=smem, size = 0x4, offset = 0x4, fixed_abs, tag = 'smem constant byte address 0x4 - core index']
  #allocation1 [shape = 'u32[72,128]{1,0:T(1,128)}', space=vmem, size = 0x9000, scoped, tag = 'internal scratch']
  %s0 = inlined_call_operand.vmem [shape: f32[2,4,256], index: 0, kind: input, shape index: {}]
  %s1 = inlined_call_operand.vmem [shape: bf16[256,32], index: 1, kind: input, shape index: {}]
  %s2 = inlined_call_operand.vmem [shape: f32[1,32], index: 2, kind: input, shape index: {}]
  %s3 = inlined_call_operand.vmem [shape: f32[1,4,32], index: 3, kind: input, shape index: {}]
  %s4 = inlined_call_operand.vmem [shape: f32[2,1,32], index: 4, kind: input, shape index: {}]
  %s5 = inlined_call_operand.vmem [shape: f32[2,1,32], index: 5, kind: input, shape index: {}]
  %s6 = inlined_call_operand.vmem [shape: bf16[2,32,96], index: 6, kind: input, shape index: {}]
  %s7 = inlined_call_operand.vmem [shape: f32[2,1,96], index: 7, kind: input, shape index: {}]
  %s8 = inlined_call_operand.vmem [shape: bf16[2,32,32], index: 8, kind: input, shape index: {}]
  %s9 = inlined_call_operand.vmem [shape: f32[2,1,32], index: 9, kind: input, shape index: {}]
  %s10 = inlined_call_operand.vmem [shape: f32[2,1,32], index: 10, kind: input, shape index: {}]
  %s11 = inlined_call_operand.vmem [shape: f32[2,1,32], index: 11, kind: input, shape index: {}]
  %s12 = inlined_call_operand.vmem [shape: bf16[2,32,128], index: 12, kind: input, shape index: {}]
  %s13 = inlined_call_operand.vmem [shape: f32[2,1,128], index: 13, kind: input, shape index: {}]
  %s14 = inlined_call_operand.vmem [shape: bf16[2,128,32], index: 14, kind: input, shape index: {}]
  %s15 = inlined_call_operand.vmem [shape: f32[2,1,32], index: 15, kind: input, shape index: {}]
  %s16 = inlined_call_operand.vmem [shape: f32[1,32], index: 16, kind: input, shape index: {}]
  %s17 = inlined_call_operand.vmem [shape: f32[1,32], index: 17, kind: input, shape index: {}]
  %s18 = inlined_call_operand.hbm [shape: f32[2,4,32], index: 18, kind: output, shape index: {}]
  %s19 = sld [smem:[#allocation0]]
  $region105: #{upstream_expert_forward.1} parent=0
    _
  %s21 = ssub.s32 1, %s19
  %s22 = scalar_select 0, %s21, %s19
  $region1: #{upstream_expert_forward.1} parent=0
    #allocation2 [shape = 'u8[4096]{0}', space=vmem, size = 0x1000, scoped, tag = 'output window, operand 0']
    #allocation3 [shape = 's32[2]{0}', space=sflag, size = 0x8, scoped, tag = 'scoped memory for upstream_expert_forward.1']
    %23 = vsyncpa [#allocation3], 0
    %s24 = scalar_lea.sflag [#allocation3], 1
    %25 = vsyncpa %s24, 0
    loop: start=0, step=1, limit=4
    $region2: #{upstream_expert_forward.1} parent=1 // loop_pre_header
      _
    $region3: #{upstream_expert_forward.1} parent=1 // loop_header
      %s27 = sphi 0, %s31
      %p28 = scmp.ge.s32.totalorder %s27, 4
      %s37 = sphi 0, %s39
      %s40 = sphi 0, %s37
      %s41 = sphi 0, %s40
      %s57 = sphi 0, %s41
      %s61 = sphi 0, %s61
      %s63 = sphi 0, %s61
      %s64 = sphi 0, %s63
      %s78 = sphi 0, %s64
      %s82 = sphi 0, %s82
      %s84 = sphi 0, %s82
      %s85 = sphi 0, %s84
      %s99 = sphi 0, %s85
      %s103 = sphi 0, %s103
      %s105 = sphi 0, %s103
      %s106 = sphi 0, %s105
      %s120 = sphi 0, %s106
      %s124 = sphi 0, %s124
      %s126 = sphi 0, %s124
      %s127 = sphi 0, %s126
      %s141 = sphi 0, %s127
      %s145 = sphi 0, %s145
      %s147 = sphi 0, %s145
      %s148 = sphi 0, %s147
      %s162 = sphi 0, %s148
      %s166 = sphi 0, %s166
      %s168 = sphi 0, %s166
      %s169 = sphi 0, %s168
      %s183 = sphi 0, %s169
      %s187 = sphi 0, %s187
      %s189 = sphi 0, %s187
      %s190 = sphi 0, %s189
      %s204 = sphi 0, %s190
      %s208 = sphi 0, %s208
      %s210 = sphi 0, %s208
      %s211 = sphi 0, %s210
      %s225 = sphi 0, %s211
      %s229 = sphi 0, %s229
      %s231 = sphi 0, %s229
      %s232 = sphi 0, %s231
      %s246 = sphi 0, %s232
      %s250 = sphi 0, %s250
      %s252 = sphi 0, %s250
      %s253 = sphi 0, %s252
      %s267 = sphi 0, %s253
      %s271 = sphi 0, %s271
      %s273 = sphi 0, %s271
      %s274 = sphi 0, %s273
      %s288 = sphi 0, %s274
      %s292 = sphi 0, %s292
      %s294 = sphi 0, %s292
      %s295 = sphi 0, %s294
      %s309 = sphi 0, %s295
      %s313 = sphi 0, %s313
      %s315 = sphi 0, %s313
      %s316 = sphi 0, %s315
      %s330 = sphi 0, %s316
      %s334 = sphi 0, %s334
      %s336 = sphi 0, %s334
      %s337 = sphi 0, %s336
      %s351 = sphi 0, %s337
      %s355 = sphi 0, %s355
      %s357 = sphi 0, %s355
      %s358 = sphi 0, %s357
      %s372 = sphi 0, %s358
      %s376 = sphi 0, %s376
      %s378 = sphi 0, %s376
      %s379 = sphi 0, %s378
      %s393 = sphi 0, %s379
      %s397 = sphi 0, %s397
      %s399 = sphi 0, %s397
      %s400 = sphi 0, %s399
      %s414 = sphi 0, %s400
      %s420 = sphi 0, %s422
      %s423 = sphi 0, %s420
      %s424 = sphi 0, %s423
      %s440 = sphi 0, %s424
    $region4: #{upstream_expert_forward.1} parent=1 // loop_header_branch
      %30 = sbr.rel (%p28) target = $region8
    $region5: #{upstream_expert_forward.1} parent=1 // loop_body
      %s32 = ssub.s32 %s27, 1
      %s33 = ssub.s32 %s27, 2
      %s34 = sadd.s32 %s27, 1
      %s35 = ssub.s32 %s27, %s34
      %p36 = scmp.eq.s32.totalorder %s35, 0
      %s38 = sadd.s32 %s37, 1
      %s39 = scalar_select %p36, %s37, %s38
      %p42 = pneg %p36
      %p43 = scmp.eq.s32.totalorder %s27, 1
      %p44 = por %p42, %p43
      %p45 = scmp.ne.s32.totalorder %s37, %s40
      %p46 = scmp.eq.s32.totalorder %s27, 0
      %p47 = por %p45, %p46
      %p48 = scmp.ne.s32.totalorder %s37, %s40
      %p49 = scmp.eq.s32.totalorder %s32, 1
      %p50 = por %p48, %p49
      %p51 = scmp.ne.s32.totalorder %s40, %s41
      %p52 = scmp.eq.s32.totalorder %s32, 0
      %p53 = por %p51, %p52
      %p54 = scmp.ne.s32.totalorder %s40, %s41
      %p55 = scmp.eq.s32.totalorder %s33, 1
      %p56 = por %p54, %p55
      %p58 = scmp.ne.s32.totalorder %s41, %s57
      %p59 = scmp.eq.s32.totalorder %s33, 0
      %p60 = por %p58, %p59
      %s62 = sadd.s32 %s61, 1
      %p65 = scmp.eq.s32.totalorder %s27, 1
      %p66 = scmp.ne.s32.totalorder %s61, %s63
      %p67 = scmp.eq.s32.totalorder %s27, 0
      %p68 = por %p66, %p67
      %p69 = scmp.ne.s32.totalorder %s61, %s63
      %p70 = scmp.eq.s32.totalorder %s32, 1
      %p71 = por %p69, %p70
      %p72 = scmp.ne.s32.totalorder %s63, %s64
      %p73 = scmp.eq.s32.totalorder %s32, 0
      %p74 = por %p72, %p73
      %p75 = scmp.ne.s32.totalorder %s63, %s64
      %p76 = scmp.eq.s32.totalorder %s33, 1
      %p77 = por %p75, %p76
      %p79 = scmp.ne.s32.totalorder %s64, %s78
      %p80 = scmp.eq.s32.totalorder %s33, 0
      %p81 = por %p79, %p80
      %s83 = sadd.s32 %s82, 1
      %p86 = scmp.eq.s32.totalorder %s27, 1
      %p87 = scmp.ne.s32.totalorder %s82, %s84
      %p88 = scmp.eq.s32.totalorder %s27, 0
      %p89 = por %p87, %p88
      %p90 = scmp.ne.s32.totalorder %s82, %s84
      %p91 = scmp.eq.s32.totalorder %s32, 1
      %p92 = por %p90, %p91
      %p93 = scmp.ne.s32.totalorder %s84, %s85
      %p94 = scmp.eq.s32.totalorder %s32, 0
      %p95 = por %p93, %p94
      %p96 = scmp.ne.s32.totalorder %s84, %s85
      %p97 = scmp.eq.s32.totalorder %s33, 1
      %p98 = por %p96, %p97
      %p100 = scmp.ne.s32.totalorder %s85, %s99
      %p101 = scmp.eq.s32.totalorder %s33, 0
      %p102 = por %p100, %p101
      %s104 = sadd.s32 %s103, 1
      %p107 = scmp.eq.s32.totalorder %s27, 1
      %p108 = scmp.ne.s32.totalorder %s103, %s105
      %p109 = scmp.eq.s32.totalorder %s27, 0
      %p110 = por %p108, %p109
      %p111 = scmp.ne.s32.totalorder %s103, %s105
      %p112 = scmp.eq.s32.totalorder %s32, 1
      %p113 = por %p111, %p112
      %p114 = scmp.ne.s32.totalorder %s105, %s106
      %p115 = scmp.eq.s32.totalorder %s32, 0
      %p116 = por %p114, %p115
      %p117 = scmp.ne.s32.totalorder %s105, %s106
      %p118 = scmp.eq.s32.totalorder %s33, 1
      %p119 = por %p117, %p118
      %p121 = scmp.ne.s32.totalorder %s106, %s120
      %p122 = scmp.eq.s32.totalorder %s33, 0
      %p123 = por %p121, %p122
      %s125 = sadd.s32 %s124, 1
      %p128 = scmp.eq.s32.totalorder %s27, 1
      %p129 = scmp.ne.s32.totalorder %s124, %s126
      %p130 = scmp.eq.s32.totalorder %s27, 0
      %p131 = por %p129, %p130
      %p132 = scmp.ne.s32.totalorder %s124, %s126
      %p133 = scmp.eq.s32.totalorder %s32, 1
      %p134 = por %p132, %p133
      %p135 = scmp.ne.s32.totalorder %s126, %s127
      %p136 = scmp.eq.s32.totalorder %s32, 0
      %p137 = por %p135, %p136
      %p138 = scmp.ne.s32.totalorder %s126, %s127
      %p139 = scmp.eq.s32.totalorder %s33, 1
      %p140 = por %p138, %p139
      %p142 = scmp.ne.s32.totalorder %s127, %s141
      %p143 = scmp.eq.s32.totalorder %s33, 0
      %p144 = por %p142, %p143
      %s146 = sadd.s32 %s145, 1
      %p149 = scmp.eq.s32.totalorder %s27, 1
      %p150 = scmp.ne.s32.totalorder %s145, %s147
      %p151 = scmp.eq.s32.totalorder %s27, 0
      %p152 = por %p150, %p151
      %p153 = scmp.ne.s32.totalorder %s145, %s147
      %p154 = scmp.eq.s32.totalorder %s32, 1
      %p155 = por %p153, %p154
      %p156 = scmp.ne.s32.totalorder %s147, %s148
      %p157 = scmp.eq.s32.totalorder %s32, 0
      %p158 = por %p156, %p157
      %p159 = scmp.ne.s32.totalorder %s147, %s148
      %p160 = scmp.eq.s32.totalorder %s33, 1
      %p161 = por %p159, %p160
      %p163 = scmp.ne.s32.totalorder %s148, %s162
      %p164 = scmp.eq.s32.totalorder %s33, 0
      %p165 = por %p163, %p164
      %s167 = sadd.s32 %s166, 1
      %p170 = scmp.eq.s32.totalorder %s27, 1
      %p171 = scmp.ne.s32.totalorder %s166, %s168
      %p172 = scmp.eq.s32.totalorder %s27, 0
      %p173 = por %p171, %p172
      %p174 = scmp.ne.s32.totalorder %s166, %s168
      %p175 = scmp.eq.s32.totalorder %s32, 1
      %p176 = por %p174, %p175
      %p177 = scmp.ne.s32.totalorder %s168, %s169
      %p178 = scmp.eq.s32.totalorder %s32, 0
      %p179 = por %p177, %p178
      %p180 = scmp.ne.s32.totalorder %s168, %s169
      %p181 = scmp.eq.s32.totalorder %s33, 1
      %p182 = por %p180, %p181
      %p184 = scmp.ne.s32.totalorder %s169, %s183
      %p185 = scmp.eq.s32.totalorder %s33, 0
      %p186 = por %p184, %p185
      %s188 = sadd.s32 %s187, 1
      %p191 = scmp.eq.s32.totalorder %s27, 1
      %p192 = scmp.ne.s32.totalorder %s187, %s189
      %p193 = scmp.eq.s32.totalorder %s27, 0
      %p194 = por %p192, %p193
      %p195 = scmp.ne.s32.totalorder %s187, %s189
      %p196 = scmp.eq.s32.totalorder %s32, 1
      %p197 = por %p195, %p196
      %p198 = scmp.ne.s32.totalorder %s189, %s190
      %p199 = scmp.eq.s32.totalorder %s32, 0
      %p200 = por %p198, %p199
      %p201 = scmp.ne.s32.totalorder %s189, %s190
      %p202 = scmp.eq.s32.totalorder %s33, 1
      %p203 = por %p201, %p202
      %p205 = scmp.ne.s32.totalorder %s190, %s204
      %p206 = scmp.eq.s32.totalorder %s33, 0
      %p207 = por %p205, %p206
      %s209 = sadd.s32 %s208, 1
      %p212 = scmp.eq.s32.totalorder %s27, 1
      %p213 = scmp.ne.s32.totalorder %s208, %s210
      %p214 = scmp.eq.s32.totalorder %s27, 0
      %p215 = por %p213, %p214
      %p216 = scmp.ne.s32.totalorder %s208, %s210
      %p217 = scmp.eq.s32.totalorder %s32, 1
      %p218 = por %p216, %p217
      %p219 = scmp.ne.s32.totalorder %s210, %s211
      %p220 = scmp.eq.s32.totalorder %s32, 0
      %p221 = por %p219, %p220
      %p222 = scmp.ne.s32.totalorder %s210, %s211
      %p223 = scmp.eq.s32.totalorder %s33, 1
      %p224 = por %p222, %p223
      %p226 = scmp.ne.s32.totalorder %s211, %s225
      %p227 = scmp.eq.s32.totalorder %s33, 0
      %p228 = por %p226, %p227
      %s230 = sadd.s32 %s229, 1
      %p233 = scmp.eq.s32.totalorder %s27, 1
      %p234 = scmp.ne.s32.totalorder %s229, %s231
      %p235 = scmp.eq.s32.totalorder %s27, 0
      %p236 = por %p234, %p235
      %p237 = scmp.ne.s32.totalorder %s229, %s231
      %p238 = scmp.eq.s32.totalorder %s32, 1
      %p239 = por %p237, %p238
      %p240 = scmp.ne.s32.totalorder %s231, %s232
      %p241 = scmp.eq.s32.totalorder %s32, 0
      %p242 = por %p240, %p241
      %p243 = scmp.ne.s32.totalorder %s231, %s232
      %p244 = scmp.eq.s32.totalorder %s33, 1
      %p245 = por %p243, %p244
      %p247 = scmp.ne.s32.totalorder %s232, %s246
      %p248 = scmp.eq.s32.totalorder %s33, 0
      %p249 = por %p247, %p248
      %s251 = sadd.s32 %s250, 1
      %p254 = scmp.eq.s32.totalorder %s27, 1
      %p255 = scmp.ne.s32.totalorder %s250, %s252
      %p256 = scmp.eq.s32.totalorder %s27, 0
      %p257 = por %p255, %p256
      %p258 = scmp.ne.s32.totalorder %s250, %s252
      %p259 = scmp.eq.s32.totalorder %s32, 1
      %p260 = por %p258, %p259
      %p261 = scmp.ne.s32.totalorder %s252, %s253
      %p262 = scmp.eq.s32.totalorder %s32, 0
      %p263 = por %p261, %p262
      %p264 = scmp.ne.s32.totalorder %s252, %s253
      %p265 = scmp.eq.s32.totalorder %s33, 1
      %p266 = por %p264, %p265
      %p268 = scmp.ne.s32.totalorder %s253, %s267
      %p269 = scmp.eq.s32.totalorder %s33, 0
      %p270 = por %p268, %p269
      %s272 = sadd.s32 %s271, 1
      %p275 = scmp.eq.s32.totalorder %s27, 1
      %p276 = scmp.ne.s32.totalorder %s271, %s273
      %p277 = scmp.eq.s32.totalorder %s27, 0
      %p278 = por %p276, %p277
      %p279 = scmp.ne.s32.totalorder %s271, %s273
      %p280 = scmp.eq.s32.totalorder %s32, 1
      %p281 = por %p279, %p280
      %p282 = scmp.ne.s32.totalorder %s273, %s274
      %p283 = scmp.eq.s32.totalorder %s32, 0
      %p284 = por %p282, %p283
      %p285 = scmp.ne.s32.totalorder %s273, %s274
      %p286 = scmp.eq.s32.totalorder %s33, 1
      %p287 = por %p285, %p286
      %p289 = scmp.ne.s32.totalorder %s274, %s288
      %p290 = scmp.eq.s32.totalorder %s33, 0
      %p291 = por %p289, %p290
      %s293 = sadd.s32 %s292, 1
      %p296 = scmp.eq.s32.totalorder %s27, 1
      %p297 = scmp.ne.s32.totalorder %s292, %s294
      %p298 = scmp.eq.s32.totalorder %s27, 0
      %p299 = por %p297, %p298
      %p300 = scmp.ne.s32.totalorder %s292, %s294
      %p301 = scmp.eq.s32.totalorder %s32, 1
      %p302 = por %p300, %p301
      %p303 = scmp.ne.s32.totalorder %s294, %s295
      %p304 = scmp.eq.s32.totalorder %s32, 0
      %p305 = por %p303, %p304
      %p306 = scmp.ne.s32.totalorder %s294, %s295
      %p307 = scmp.eq.s32.totalorder %s33, 1
      %p308 = por %p306, %p307
      %p310 = scmp.ne.s32.totalorder %s295, %s309
      %p311 = scmp.eq.s32.totalorder %s33, 0
      %p312 = por %p310, %p311
      %s314 = sadd.s32 %s313, 1
      %p317 = scmp.eq.s32.totalorder %s27, 1
      %p318 = scmp.ne.s32.totalorder %s313, %s315
      %p319 = scmp.eq.s32.totalorder %s27, 0
      %p320 = por %p318, %p319
      %p321 = scmp.ne.s32.totalorder %s313, %s315
      %p322 = scmp.eq.s32.totalorder %s32, 1
      %p323 = por %p321, %p322
      %p324 = scmp.ne.s32.totalorder %s315, %s316
      %p325 = scmp.eq.s32.totalorder %s32, 0
      %p326 = por %p324, %p325
      %p327 = scmp.ne.s32.totalorder %s315, %s316
      %p328 = scmp.eq.s32.totalorder %s33, 1
      %p329 = por %p327, %p328
      %p331 = scmp.ne.s32.totalorder %s316, %s330
      %p332 = scmp.eq.s32.totalorder %s33, 0
      %p333 = por %p331, %p332
      %s335 = sadd.s32 %s334, 1
      %p338 = scmp.eq.s32.totalorder %s27, 1
      %p339 = scmp.ne.s32.totalorder %s334, %s336
      %p340 = scmp.eq.s32.totalorder %s27, 0
      %p341 = por %p339, %p340
      %p342 = scmp.ne.s32.totalorder %s334, %s336
      %p343 = scmp.eq.s32.totalorder %s32, 1
      %p344 = por %p342, %p343
      %p345 = scmp.ne.s32.totalorder %s336, %s337
      %p346 = scmp.eq.s32.totalorder %s32, 0
      %p347 = por %p345, %p346
      %p348 = scmp.ne.s32.totalorder %s336, %s337
      %p349 = scmp.eq.s32.totalorder %s33, 1
      %p350 = por %p348, %p349
      %p352 = scmp.ne.s32.totalorder %s337, %s351
      %p353 = scmp.eq.s32.totalorder %s33, 0
      %p354 = por %p352, %p353
      %s356 = sadd.s32 %s355, 1
      %p359 = scmp.eq.s32.totalorder %s27, 1
      %p360 = scmp.ne.s32.totalorder %s355, %s357
      %p361 = scmp.eq.s32.totalorder %s27, 0
      %p362 = por %p360, %p361
      %p363 = scmp.ne.s32.totalorder %s355, %s357
      %p364 = scmp.eq.s32.totalorder %s32, 1
      %p365 = por %p363, %p364
      %p366 = scmp.ne.s32.totalorder %s357, %s358
      %p367 = scmp.eq.s32.totalorder %s32, 0
      %p368 = por %p366, %p367
      %p369 = scmp.ne.s32.totalorder %s357, %s358
      %p370 = scmp.eq.s32.totalorder %s33, 1
      %p371 = por %p369, %p370
      %p373 = scmp.ne.s32.totalorder %s358, %s372
      %p374 = scmp.eq.s32.totalorder %s33, 0
      %p375 = por %p373, %p374
      %s377 = sadd.s32 %s376, 1
      %p380 = scmp.eq.s32.totalorder %s27, 1
      %p381 = scmp.ne.s32.totalorder %s376, %s378
      %p382 = scmp.eq.s32.totalorder %s27, 0
      %p383 = por %p381, %p382
      %p384 = scmp.ne.s32.totalorder %s376, %s378
      %p385 = scmp.eq.s32.totalorder %s32, 1
      %p386 = por %p384, %p385
      %p387 = scmp.ne.s32.totalorder %s378, %s379
      %p388 = scmp.eq.s32.totalorder %s32, 0
      %p389 = por %p387, %p388
      %p390 = scmp.ne.s32.totalorder %s378, %s379
      %p391 = scmp.eq.s32.totalorder %s33, 1
      %p392 = por %p390, %p391
      %p394 = scmp.ne.s32.totalorder %s379, %s393
      %p395 = scmp.eq.s32.totalorder %s33, 0
      %p396 = por %p394, %p395
      %s398 = sadd.s32 %s397, 1
      %p401 = scmp.eq.s32.totalorder %s27, 1
      %p402 = scmp.ne.s32.totalorder %s397, %s399
      %p403 = scmp.eq.s32.totalorder %s27, 0
      %p404 = por %p402, %p403
      %p405 = scmp.ne.s32.totalorder %s397, %s399
      %p406 = scmp.eq.s32.totalorder %s32, 1
      %p407 = por %p405, %p406
      %p408 = scmp.ne.s32.totalorder %s399, %s400
      %p409 = scmp.eq.s32.totalorder %s32, 0
      %p410 = por %p408, %p409
      %p411 = scmp.ne.s32.totalorder %s399, %s400
      %p412 = scmp.eq.s32.totalorder %s33, 1
      %p413 = por %p411, %p412
      %p415 = scmp.ne.s32.totalorder %s400, %s414
      %p416 = scmp.eq.s32.totalorder %s33, 0
      %p417 = por %p415, %p416
      %s418 = ssub.s32 %s27, %s34
      %p419 = scmp.eq.s32.totalorder %s418, 0
      %s421 = sadd.s32 %s420, 1
      %s422 = scalar_select %p419, %s420, %s421
      %p425 = pneg %p419
      %p426 = scmp.eq.s32.totalorder %s27, 1
      %p427 = por %p425, %p426
      %p428 = scmp.ne.s32.totalorder %s420, %s423
      %p429 = scmp.eq.s32.totalorder %s27, 0
      %p430 = por %p428, %p429
      %p431 = scmp.ne.s32.totalorder %s420, %s423
      %p432 = scmp.eq.s32.totalorder %s32, 1
      %p433 = por %p431, %p432
      %p434 = scmp.ne.s32.totalorder %s423, %s424
      %p435 = scmp.eq.s32.totalorder %s32, 0
      %p436 = por %p434, %p435
      %p437 = scmp.ne.s32.totalorder %s423, %s424
      %p438 = scmp.eq.s32.totalorder %s33, 1
      %p439 = por %p437, %p438
      %p441 = scmp.ne.s32.totalorder %s424, %s440
      %p442 = scmp.eq.s32.totalorder %s33, 0
      %p443 = por %p441, %p442
      %p444 = scmp.le.s32.totalorder 1, %s27
      %p445 = scmp.lt.s32.totalorder %s27, 3
      %p446 = pnand %p444, %p445
      %p447 = pneg %p446
      // Predicated region
      $region9: #{upstream_expert_forward.1} parent=5 // pred_check
        _
      $region10: #{upstream_expert_forward.1} parent=5 // pred_check_branch
        %449 = sbr.rel (%p446) target = $region12
      $region11: #{upstream_expert_forward.1} parent=5 // pred_region
        %s450 = ssub.s32 %s27, 1
        // Predicated region
        $region13: #{upstream_expert_forward.1} parent=11 // pred_check
          %p451 = pneg %p74
        $region14: #{upstream_expert_forward.1} parent=11 // pred_check_branch
          %453 = sbr.rel (%p451) target = $region16
        $region15: #{upstream_expert_forward.1} parent=11 // pred_region
          _
        $region16: #{upstream_expert_forward.1} parent=11 // pred_fallthru
          _
        // Predicated region
        $region17: #{upstream_expert_forward.1} parent=11 // pred_check
          %p454 = pneg %p95
        $region18: #{upstream_expert_forward.1} parent=11 // pred_check_branch
          %456 = sbr.rel (%p454) target = $region20
        $region19: #{upstream_expert_forward.1} parent=11 // pred_region
          _
        $region20: #{upstream_expert_forward.1} parent=11 // pred_fallthru
          _
        // Predicated region
        $region21: #{upstream_expert_forward.1} parent=11 // pred_check
          %p457 = pneg %p116
        $region22: #{upstream_expert_forward.1} parent=11 // pred_check_branch
          %459 = sbr.rel (%p457) target = $region24
        $region23: #{upstream_expert_forward.1} parent=11 // pred_region
          _
        $region24: #{upstream_expert_forward.1} parent=11 // pred_fallthru
          _
        // Predicated region
        $region25: #{upstream_expert_forward.1} parent=11 // pred_check
          %p460 = pneg %p137
        $region26: #{upstream_expert_forward.1} parent=11 // pred_check_branch
          %462 = sbr.rel (%p460) target = $region28
        $region27: #{upstream_expert_forward.1} parent=11 // pred_region
          _
        $region28: #{upstream_expert_forward.1} parent=11 // pred_fallthru
          _
        // Predicated region
        $region29: #{upstream_expert_forward.1} parent=11 // pred_check
          %p463 = pneg %p158
        $region30: #{upstream_expert_forward.1} parent=11 // pred_check_branch
          %465 = sbr.rel (%p463) target = $region32
        $region31: #{upstream_expert_forward.1} parent=11 // pred_region
          _
        $region32: #{upstream_expert_forward.1} parent=11 // pred_fallthru
          _
        // Predicated region
        $region33: #{upstream_expert_forward.1} parent=11 // pred_check
          %p466 = pneg %p179
        $region34: #{upstream_expert_forward.1} parent=11 // pred_check_branch
          %468 = sbr.rel (%p466) target = $region36
        $region35: #{upstream_expert_forward.1} parent=11 // pred_region
          _
        $region36: #{upstream_expert_forward.1} parent=11 // pred_fallthru
          _
        // Predicated region
        $region37: #{upstream_expert_forward.1} parent=11 // pred_check
          %p469 = pneg %p200
        $region38: #{upstream_expert_forward.1} parent=11 // pred_check_branch
          %471 = sbr.rel (%p469) target = $region40
        $region39: #{upstream_expert_forward.1} parent=11 // pred_region
          _
        $region40: #{upstream_expert_forward.1} parent=11 // pred_fallthru
          _
        // Predicated region
        $region41: #{upstream_expert_forward.1} parent=11 // pred_check
          %p472 = pneg %p221
        $region42: #{upstream_expert_forward.1} parent=11 // pred_check_branch
          %474 = sbr.rel (%p472) target = $region44
        $region43: #{upstream_expert_forward.1} parent=11 // pred_region
          _
        $region44: #{upstream_expert_forward.1} parent=11 // pred_fallthru
          _
        // Predicated region
        $region45: #{upstream_expert_forward.1} parent=11 // pred_check
          %p475 = pneg %p242
        $region46: #{upstream_expert_forward.1} parent=11 // pred_check_branch
          %477 = sbr.rel (%p475) target = $region48
        $region47: #{upstream_expert_forward.1} parent=11 // pred_region
          _
        $region48: #{upstream_expert_forward.1} parent=11 // pred_fallthru
          _
        // Predicated region
        $region49: #{upstream_expert_forward.1} parent=11 // pred_check
          %p478 = pneg %p263
        $region50: #{upstream_expert_forward.1} parent=11 // pred_check_branch
          %480 = sbr.rel (%p478) target = $region52
        $region51: #{upstream_expert_forward.1} parent=11 // pred_region
          _
        $region52: #{upstream_expert_forward.1} parent=11 // pred_fallthru
          _
        // Predicated region
        $region53: #{upstream_expert_forward.1} parent=11 // pred_check
          %p481 = pneg %p284
        $region54: #{upstream_expert_forward.1} parent=11 // pred_check_branch
          %483 = sbr.rel (%p481) target = $region56
        $region55: #{upstream_expert_forward.1} parent=11 // pred_region
          _
        $region56: #{upstream_expert_forward.1} parent=11 // pred_fallthru
          _
        // Predicated region
        $region57: #{upstream_expert_forward.1} parent=11 // pred_check
          %p484 = pneg %p305
        $region58: #{upstream_expert_forward.1} parent=11 // pred_check_branch
          %486 = sbr.rel (%p484) target = $region60
        $region59: #{upstream_expert_forward.1} parent=11 // pred_region
          _
        $region60: #{upstream_expert_forward.1} parent=11 // pred_fallthru
          _
        // Predicated region
        $region61: #{upstream_expert_forward.1} parent=11 // pred_check
          %p487 = pneg %p326
        $region62: #{upstream_expert_forward.1} parent=11 // pred_check_branch
          %489 = sbr.rel (%p487) target = $region64
        $region63: #{upstream_expert_forward.1} parent=11 // pred_region
          _
        $region64: #{upstream_expert_forward.1} parent=11 // pred_fallthru
          _
        // Predicated region
        $region65: #{upstream_expert_forward.1} parent=11 // pred_check
          %p490 = pneg %p347
        $region66: #{upstream_expert_forward.1} parent=11 // pred_check_branch
          %492 = sbr.rel (%p490) target = $region68
        $region67: #{upstream_expert_forward.1} parent=11 // pred_region
          _
        $region68: #{upstream_expert_forward.1} parent=11 // pred_fallthru
          _
        // Predicated region
        $region69: #{upstream_expert_forward.1} parent=11 // pred_check
          %p493 = pneg %p368
        $region70: #{upstream_expert_forward.1} parent=11 // pred_check_branch
          %495 = sbr.rel (%p493) target = $region72
        $region71: #{upstream_expert_forward.1} parent=11 // pred_region
          _
        $region72: #{upstream_expert_forward.1} parent=11 // pred_fallthru
          _
        // Predicated region
        $region73: #{upstream_expert_forward.1} parent=11 // pred_check
          %p496 = pneg %p389
        $region74: #{upstream_expert_forward.1} parent=11 // pred_check_branch
          %498 = sbr.rel (%p496) target = $region76
        $region75: #{upstream_expert_forward.1} parent=11 // pred_region
          _
        $region76: #{upstream_expert_forward.1} parent=11 // pred_fallthru
          _
        // Predicated region
        $region77: #{upstream_expert_forward.1} parent=11 // pred_check
          %p499 = pneg %p410
        $region78: #{upstream_expert_forward.1} parent=11 // pred_check_branch
          %501 = sbr.rel (%p499) target = $region80
        $region79: #{upstream_expert_forward.1} parent=11 // pred_region
          _
        $region80: #{upstream_expert_forward.1} parent=11 // pred_fallthru
          _
      $region12: #{upstream_expert_forward.1} parent=5 // pred_fallthru
        _
      %p502 = scmp.lt.s32.totalorder %s27, 2
      // Predicated region
      $region81: #{upstream_expert_forward.1} parent=5 // pred_check
        %p503 = pneg %p502
      $region82: #{upstream_expert_forward.1} parent=5 // pred_check_branch
        %505 = sbr.rel (%p503) target = $region84
      $region83: #{upstream_expert_forward.1} parent=5 // pred_region
        // Predicated region
        $region85: #{upstream_expert_forward.1} parent=83 // pred_check
          %p506 = pneg %p47
        $region86: #{upstream_expert_forward.1} parent=83 // pred_check_branch
          %508 = sbr.rel (%p506) target = $region88
        $region87: #{upstream_expert_forward.1} parent=83 // pred_region
          %p509 = scmp.lt.s32.totalorder %s27, 1
          %s510 = scalar_select %p509, %s27, 1
          %s511 = smul.addr %s510, 2
          %s512 = smul.addr %s511, 4
          %s513 = scalar_lea.vmem %s0, %s512
        $region88: #{upstream_expert_forward.1} parent=83 // pred_fallthru
          _
      $region84: #{upstream_expert_forward.1} parent=5 // pred_fallthru
        _
      %p514 = scmp.le.s32.totalorder 1, %s27
      %p515 = scmp.lt.s32.totalorder %s27, 3
      %p516 = pnand %p514, %p515
      %p517 = pneg %p516
      // Predicated region
      $region89: #{upstream_expert_forward.1} parent=5 // pred_check
        _
      $region90: #{upstream_expert_forward.1} parent=5 // pred_check_branch
        %519 = sbr.rel (%p516) target = $region92
      $region91: #{upstream_expert_forward.1} parent=5 // pred_region
        %s520 = ssub.s32 %s27, 1
        %p521 = scmp.lt.s32.totalorder %s32, 1
        %s522 = scalar_select %p521, %s32, 1
        %s523 = smul.addr %s522, 2
        %s524 = smul.addr %s523, 4
        %s525 = scalar_lea.vmem %s0, %s524
        %p526 = pneg %p53
        %p527 = pneg %p50
        %p528 = pneg %p74
        %p529 = pneg %p71
        %p530 = pneg %p95
        %p531 = pneg %p92
        %p532 = pneg %p116
        %p533 = pneg %p113
        %p534 = pneg %p137
        %p535 = pneg %p134
        %p536 = pneg %p158
        %p537 = pneg %p155
        %p538 = pneg %p179
        %p539 = pneg %p176
        %p540 = pneg %p200
        %p541 = pneg %p197
        %p542 = pneg %p221
        %p543 = pneg %p218
        %p544 = pneg %p242
        %p545 = pneg %p239
        %p546 = pneg %p263
        %p547 = pneg %p260
        %p548 = pneg %p284
        %p549 = pneg %p281
        %p550 = pneg %p305
        %p551 = pneg %p302
        %p552 = pneg %p326
        %p553 = pneg %p323
        %p554 = pneg %p347
        %p555 = pneg %p344
        %p556 = pneg %p368
        %p557 = pneg %p365
        %p558 = pneg %p389
        %p559 = pneg %p386
        %p560 = pneg %p410
        %p561 = pneg %p407
        %p562 = pneg %p436
        %p563 = pneg %p433
        %s564 = sand.u32 %s423, 1
        %s565 = scalar_lea.sflag [#allocation3], %s564
        %s566 = sand.u32 %s423, 1
        %s567 = smul.addr %s566, 4
        %s568 = scalar_lea.vmem [#allocation2], %s567
        %p569 = scmp.lt.s32.totalorder %s32, 1
        %s570 = scalar_select %p569, %s32, 1
        %s571 = smul.addr %s570, 2
        %s572 = smul.addr %s571, 4
        %s573 = scalar_lea.vmem %s0, %s572
        %v575 = vld [vmem:[%s573] sm:$0xff]
        %v576 = vld [vmem:[%s1] sm:$0xf]
        %v577 = vld [vmem:[%s1 + $0x4] sm:$0xf]
        %v578 = vld [vmem:[%s1 + $0x8] sm:$0xf]
        %v579 = vld [vmem:[%s1 + $0xc] sm:$0xf]
        %v580 = vld [vmem:[%s1 + $0x10] sm:$0xf]
        %v581 = vld [vmem:[%s1 + $0x14] sm:$0xf]
        %v582 = vld [vmem:[%s1 + $0x18] sm:$0xf]
        %v583 = vld [vmem:[%s1 + $0x1c] sm:$0xf]
        %v584 = vld [vmem:[%s1 + $0x20] sm:$0xf]
        %v585 = vld [vmem:[%s1 + $0x24] sm:$0xf]
        %v586 = vld [vmem:[%s1 + $0x28] sm:$0xf]
        %v587 = vld [vmem:[%s1 + $0x2c] sm:$0xf]
        %v588 = vld [vmem:[%s1 + $0x30] sm:$0xf]
        %v589 = vld [vmem:[%s1 + $0x34] sm:$0xf]
        %v590 = vld [vmem:[%s1 + $0x38] sm:$0xf]
        %v591 = vld [vmem:[%s1 + $0x3c] sm:$0xf]
        %v592 = vld [vmem:[%s1 + $0x40] sm:$0xf]
        %v593 = vld [vmem:[%s1 + $0x44] sm:$0xf]
        %v594 = vld [vmem:[%s1 + $0x48] sm:$0xf]
        %v595 = vld [vmem:[%s1 + $0x4c] sm:$0xf]
        %v596 = vld [vmem:[%s1 + $0x50] sm:$0xf]
        %v597 = vld [vmem:[%s1 + $0x54] sm:$0xf]
        %v598 = vld [vmem:[%s1 + $0x58] sm:$0xf]
        %v599 = vld [vmem:[%s1 + $0x5c] sm:$0xf]
        %v600 = vld [vmem:[%s1 + $0x60] sm:$0xf]
        %v601 = vld [vmem:[%s1 + $0x64] sm:$0xf]
        %v602 = vld [vmem:[%s1 + $0x68] sm:$0xf]
        %v603 = vld [vmem:[%s1 + $0x6c] sm:$0xf]
        %v604 = vld [vmem:[%s1 + $0x70] sm:$0xf]
        %v605 = vld [vmem:[%s1 + $0x74] sm:$0xf]
        %v606 = vld [vmem:[%s1 + $0x78] sm:$0xf]
        %v607 = vld [vmem:[%s1 + $0x7c] sm:$0xf]
        %609 = vst [vmem:[#allocation1] ss:$2 sm:$0xff] %v575
        %v610 = vld.sshfl [vmem:[#allocation1] sm:$0xff pattern:$0x75316420]
        %v611 = vld.sshfl [vmem:[#allocation1 + $0x8] sm:$0xff pattern:$0x75316420]
        %v614 = vpack.c.bf16 %v610, %v610
        %v615 = vpack.c.bf16 %v611, %v611
        %v616 = vld [vmem:[%s2] sm:$0x1]
        %v618 = vperm.slane %v616, 0
        %v652 = vunpack.c.l.b16 %v576
        %v653 = vunpack.c.l.b16 %v577
        %v654 = vunpack.c.l.b16 %v578
        %v655 = vunpack.c.l.b16 %v579
        %v656 = vunpack.c.l.b16 %v580
        %v657 = vunpack.c.l.b16 %v581
        %v658 = vunpack.c.l.b16 %v582
        %v659 = vunpack.c.l.b16 %v583
        %v660 = vunpack.c.l.b16 %v584
        %v661 = vunpack.c.l.b16 %v585
        %v662 = vunpack.c.l.b16 %v586
        %v663 = vunpack.c.l.b16 %v587
        %v664 = vunpack.c.l.b16 %v588
        %v665 = vunpack.c.l.b16 %v589
        %v666 = vunpack.c.l.b16 %v590
        %v667 = vunpack.c.l.b16 %v591
        %v668 = vunpack.c.l.b16 %v592
        %v669 = vunpack.c.l.b16 %v593
        %v670 = vunpack.c.l.b16 %v594
        %v671 = vunpack.c.l.b16 %v595
        %v672 = vunpack.c.l.b16 %v596
        %v673 = vunpack.c.l.b16 %v597
        %v674 = vunpack.c.l.b16 %v598
        %v675 = vunpack.c.l.b16 %v599
        %v676 = vunpack.c.l.b16 %v600
        %v677 = vunpack.c.l.b16 %v601
        %v678 = vunpack.c.l.b16 %v602
        %v679 = vunpack.c.l.b16 %v603
        %v680 = vunpack.c.l.b16 %v604
        %v681 = vunpack.c.l.b16 %v605
        %v682 = vunpack.c.l.b16 %v606
        %v683 = vunpack.c.l.b16 %v607
        %v684 = vpack.c.b16 %v653, %v652
        %v685 = vpack.c.b16 %v655, %v654
        %v686 = vpack.c.b16 %v657, %v656
        %v687 = vpack.c.b16 %v659, %v658
        %v688 = vpack.c.b16 %v661, %v660
        %v689 = vpack.c.b16 %v663, %v662
        %v690 = vpack.c.b16 %v665, %v664
        %v691 = vpack.c.b16 %v667, %v666
        %v692 = vpack.c.b16 %v669, %v668
        %v693 = vpack.c.b16 %v671, %v670
        %v694 = vpack.c.b16 %v673, %v672
        %v695 = vpack.c.b16 %v675, %v674
        %v696 = vpack.c.b16 %v677, %v676
        %v697 = vpack.c.b16 %v679, %v678
        %v698 = vpack.c.b16 %v681, %v680
        %v699 = vpack.c.b16 %v683, %v682
        %716 = vmatpush.bf16.msra.mxu0 %v691
        %717 = vmatpush.bf16.msra.mxu0 %v690
        %718 = vmatpush.bf16.msra.mxu0 %v689
        %719 = vmatpush.bf16.msra.mxu0 %v688
        %720 = vmatpush.bf16.msra.mxu0 %v687
        %721 = vmatpush.bf16.msra.mxu0 %v686
        %722 = vmatpush.bf16.msra.mxu0 %v685
        %723 = vmatpush.bf16.msra.mxu0 %v684
        %724 = vmatmul.bf16.gmra.mxu0 %v614
        %v725 = vpop.f32.mrf.mxu0
        %v726 = vadd.f32 %v618, %v725
        %v727 = vpop.f32.mrf.mxu0
        %728 = vdwg.mxu0
        %729 = vmatpush.bf16.msra.mxu0 %v699
        %730 = vmatpush.bf16.msra.mxu0 %v698
        %731 = vmatpush.bf16.msra.mxu0 %v697
        %732 = vmatpush.bf16.msra.mxu0 %v696
        %733 = vmatpush.bf16.msra.mxu0 %v695
        %734 = vmatpush.bf16.msra.mxu0 %v694
        %735 = vmatpush.bf16.msra.mxu0 %v693
        %736 = vmatpush.bf16.msra.mxu0 %v692
        %737 = vmatmul.bf16.gmra.mxu0 %v615
        %v738 = vpop.f32.mrf.mxu0
        %v739 = vadd.f32 %v726, %v738
        %v740 = vpop.f32.mrf.mxu0
        %741 = vdwg.mxu0
        %v742 = vld [vmem:[%s3] sm:$0xf]
        %v743 = vadd.f32 %v739, %v742
        %v744 = vld [vmem:[%s4] sm:$0x1]
        %v745 = vld [vmem:[%s5] sm:$0x1]
        %vm746 = vcmask 257024
        %v747 = vsel %vm746, %v743, 0.0
        %748 = vadd.xlane.f32.xlu0 %v747
        %v749 = vpop.xlane.xlu0 %748
        %v750 = vrcp.pop 32.0
        %v751 = vmul.f32 32.0, %v750
        %v752 = vsub.f32 1.0, %v751
        %v753 = vmul.f32 %v750, %v752
        %v754 = vadd.f32 %v750, %v753
        %vm755 = vweird.f32 %v750
        %v756 = vsel %vm755, %v750, %v754
        %v757 = vmul.f32 %v749, %v756
        %v758 = vsub.f32 %v743, %v757
        %v759 = vmul.f32 %v758, %v758
        %v760 = vsel %vm746, %v759, 0.0
        %761 = vadd.xlane.f32.xlu0 %v760
        %v762 = vpop.xlane.xlu0 %761
        %v763 = vmul.f32 %v762, %v756
        %v764 = vadd.f32 %v763, 1e-06
        %v765 = vrsqrt.pop %v764
        %v766 = vmul.f32 %v765, %v764
        %v767 = vmul.f32 %v766, %v765
        %v768 = vmul.f32 0.5, %v767
        %v769 = vsub.f32 1.5, %v768
        %v770 = vmul.f32 %v765, %v769
        %vm771 = vweird.f32 %v764
        %vm772 = vweird.f32 %v765
        %vm773 = vmor %vm771, %vm772
        %v774 = vsel %vm773, %v765, %v770
        %v775 = vmul.f32 %v758, %v774
        %v777 = vperm.slane %v744, 0
        %v779 = vmul.f32 %v775, %v777
        %v781 = vperm.slane %v745, 0
        %v783 = vadd.f32 %v779, %v781
        %v784 = vld [vmem:[%s6] sm:$0xf]
        %v785 = vld [vmem:[%s6 + $0x4] sm:$0xf]
        %v786 = vld [vmem:[%s6 + $0x8] sm:$0xf]
        %v787 = vld [vmem:[%s6 + $0xc] sm:$0xf]
        %v788 = vpack.c.bf16 %v783, %v783
        %v789 = vld [vmem:[%s7] sm:$0x1]
        %v791 = vperm.slane %v789, 0
        %v797 = vunpack.c.l.b16 %v784
        %v798 = vunpack.c.l.b16 %v785
        %v799 = vunpack.c.l.b16 %v786
        %v800 = vunpack.c.l.b16 %v787
        %v801 = vpack.c.b16 %v798, %v797
        %v802 = vpack.c.b16 %v800, %v799
        %vm805 = vcmask 261120
        %v807 = vsel %vm805, %v788, 0
        %809 = vmatpush.bf16.msra.mxu0 0
        %810 = vmatpush.bf16.msra.mxu0 0
        %811 = vmatpush.bf16.msra.mxu0 0
        %812 = vmatpush.bf16.msra.mxu0 0
        %813 = vmatpush.bf16.msra.mxu0 0
        %814 = vmatpush.bf16.msra.mxu0 0
        %815 = vmatpush.bf16.msra.mxu0 %v802
        %816 = vmatpush.bf16.msra.mxu0 %v801
        %817 = vmatmul.bf16.gmra.mxu0 %v807
        %v818 = vpop.f32.mrf.mxu0
        %v819 = vadd.f32 %v791, %v818
        %v820 = vpop.f32.mrf.mxu0
        %821 = vdwg.mxu0
        %v822 = vmul.f32 %v819, 0.35355338
        %v823 = vpack.c.bf16 %v822, %v822
        %v824 = vpack.c.bf16 %v819, %v819
        %826 = vrot.lane.b32.xlu0 %v824, 96
        %v827 = vpop.permute.xlu0 %826
        %vm828 = vcmask 64512
        %v830 = vsel %vm828, %v823, 0
        %v833 = vsel %vm828, %v827, 0
        %835 = vmatpush.bf16.xpose.msra.mxu0 0
        %836 = vmatpush.bf16.xpose.msra.mxu0 0
        %837 = vmatpush.bf16.xpose.msra.mxu0 0
        %838 = vmatpush.bf16.xpose.msra.mxu0 0
        %839 = vmatpush.bf16.xpose.msra.mxu0 0
        %840 = vmatpush.bf16.xpose.msra.mxu0 0
        %841 = vmatpush.bf16.xpose.msra.mxu0 0
        %842 = vmatpush.bf16.xpose.msra.mxu0 %v833
        %843 = vmatmul.bf16.gmra.mxu0 %v830
        %v844 = vpop.f32.mrf.mxu0
        %v845 = vadd.f32 0.0, %v844
        %v846 = vpop.f32.mrf.mxu0
        %847 = vdwg.mxu0
        %vm848 = vcmask 27648
        %v849 = vsel %vm848, %v845, -inf
        %850 = vmax.xlane.f32.xlu0 %v849
        %v851 = vpop.xlane.xlu0 %850
        %v852 = vsub.f32 %v845, %v851
        %v853 = vmul.f32 %v852, 1.442695
        %v854 = vpow.pop %v853
        %v855 = vsel %vm848, %v854, 0.0
        %856 = vadd.xlane.f32.xlu0 %v855
        %v857 = vpop.xlane.xlu0 %856
        %v858 = vrcp.pop %v857
        %v859 = vmul.f32 %v854, %v858
        %v860 = vpack.c.bf16 %v859, %v859
        %861 = vrot.lane.b32.xlu0 %v824, 64
        %v862 = vpop.permute.xlu0 %861
        %vm863 = vcmask 31744
        %v865 = vsel %vm863, %v860, 0
        %vm867 = vcmask 1041408
        %v869 = vsel %vm867, %v862, 0
        %871 = vmatpush.bf16.msra.mxu0 0
        %872 = vmatpush.bf16.msra.mxu0 0
        %873 = vmatpush.bf16.msra.mxu0 0
        %874 = vmatpush.bf16.msra.mxu0 0
        %875 = vmatpush.bf16.msra.mxu0 0
        %876 = vmatpush.bf16.msra.mxu0 0
        %877 = vmatpush.bf16.msra.mxu0 0
        %878 = vmatpush.bf16.msra.mxu0 %v869
        %879 = vmatmul.bf16.gmra.mxu0 %v865
        %v880 = vpop.f32.mrf.mxu0
        %v881 = vadd.f32 0.0, %v880
        %v882 = vpop.f32.mrf.mxu0
        %883 = vdwg.mxu0
        %885 = vrot.lane.b32.xlu0 %v823, 120
        %v886 = vpop.permute.xlu0 %885
        %887 = vrot.lane.b32.xlu0 %v824, 88
        %v888 = vpop.permute.xlu0 %887
        %v890 = vsel %vm828, %v886, 0
        %v893 = vsel %vm828, %v888, 0
        %895 = vmatpush.bf16.xpose.msra.mxu0 0
        %896 = vmatpush.bf16.xpose.msra.mxu0 0
        %897 = vmatpush.bf16.xpose.msra.mxu0 0
        %898 = vmatpush.bf16.xpose.msra.mxu0 0
        %899 = vmatpush.bf16.xpose.msra.mxu0 0
        %900 = vmatpush.bf16.xpose.msra.mxu0 0
        %901 = vmatpush.bf16.xpose.msra.mxu0 0
        %902 = vmatpush.bf16.xpose.msra.mxu0 %v893
        %903 = vmatmul.bf16.gmra.mxu0 %v890
        %v904 = vpop.f32.mrf.mxu0
        %v905 = vadd.f32 0.0, %v904
        %v906 = vpop.f32.mrf.mxu0
        %907 = vdwg.mxu0
        %v908 = vsel %vm848, %v905, -inf
        %909 = vmax.xlane.f32.xlu0 %v908
        %v910 = vpop.xlane.xlu0 %909
        %v911 = vsub.f32 %v905, %v910
        %v912 = vmul.f32 %v911, 1.442695
        %v913 = vpow.pop %v912
        %v914 = vsel %vm848, %v913, 0.0
        %915 = vadd.xlane.f32.xlu0 %v914
        %v916 = vpop.xlane.xlu0 %915
        %v917 = vrcp.pop %v916
        %v918 = vmul.f32 %v913, %v917
        %v919 = vpack.c.bf16 %v918, %v918
        %920 = vrot.lane.b32.xlu0 %v824, 56
        %v921 = vpop.permute.xlu0 %920
        %v923 = vsel %vm863, %v919, 0
        %v926 = vsel %vm867, %v921, 0
        %928 = vmatpush.bf16.msra.mxu0 0
        %929 = vmatpush.bf16.msra.mxu0 0
        %930 = vmatpush.bf16.msra.mxu0 0
        %931 = vmatpush.bf16.msra.mxu0 0
        %932 = vmatpush.bf16.msra.mxu0 0
        %933 = vmatpush.bf16.msra.mxu0 0
        %934 = vmatpush.bf16.msra.mxu0 0
        %935 = vmatpush.bf16.msra.mxu0 %v926
        %936 = vmatmul.bf16.gmra.mxu0 %v923
        %v937 = vpop.f32.mrf.mxu0
        %v938 = vadd.f32 0.0, %v937
        %v939 = vpop.f32.mrf.mxu0
        %940 = vdwg.mxu0
        %941 = vrot.lane.b32.xlu0 %v823, 112
        %v942 = vpop.permute.xlu0 %941
        %943 = vrot.lane.b32.xlu0 %v824, 80
        %v944 = vpop.permute.xlu0 %943
        %v946 = vsel %vm828, %v942, 0
        %v949 = vsel %vm828, %v944, 0
        %951 = vmatpush.bf16.xpose.msra.mxu0 0
        %952 = vmatpush.bf16.xpose.msra.mxu0 0
        %953 = vmatpush.bf16.xpose.msra.mxu0 0
        %954 = vmatpush.bf16.xpose.msra.mxu0 0
        %955 = vmatpush.bf16.xpose.msra.mxu0 0
        %956 = vmatpush.bf16.xpose.msra.mxu0 0
        %957 = vmatpush.bf16.xpose.msra.mxu0 0
        %958 = vmatpush.bf16.xpose.msra.mxu0 %v949
        %959 = vmatmul.bf16.gmra.mxu0 %v946
        %v960 = vpop.f32.mrf.mxu0
        %v961 = vadd.f32 0.0, %v960
        %v962 = vpop.f32.mrf.mxu0
        %963 = vdwg.mxu0
        %v964 = vsel %vm848, %v961, -inf
        %965 = vmax.xlane.f32.xlu0 %v964
        %v966 = vpop.xlane.xlu0 %965
        %v967 = vsub.f32 %v961, %v966
        %v968 = vmul.f32 %v967, 1.442695
        %v969 = vpow.pop %v968
        %v970 = vsel %vm848, %v969, 0.0
        %971 = vadd.xlane.f32.xlu0 %v970
        %v972 = vpop.xlane.xlu0 %971
        %v973 = vrcp.pop %v972
        %v974 = vmul.f32 %v969, %v973
        %v975 = vpack.c.bf16 %v974, %v974
        %976 = vrot.lane.b32.xlu0 %v824, 48
        %v977 = vpop.permute.xlu0 %976
        %v979 = vsel %vm863, %v975, 0
        %v982 = vsel %vm867, %v977, 0
        %984 = vmatpush.bf16.msra.mxu0 0
        %985 = vmatpush.bf16.msra.mxu0 0
        %986 = vmatpush.bf16.msra.mxu0 0
        %987 = vmatpush.bf16.msra.mxu0 0
        %988 = vmatpush.bf16.msra.mxu0 0
        %989 = vmatpush.bf16.msra.mxu0 0
        %990 = vmatpush.bf16.msra.mxu0 0
        %991 = vmatpush.bf16.msra.mxu0 %v982
        %992 = vmatmul.bf16.gmra.mxu0 %v979
        %v993 = vpop.f32.mrf.mxu0
        %v994 = vadd.f32 0.0, %v993
        %v995 = vpop.f32.mrf.mxu0
        %996 = vdwg.mxu0
        %997 = vrot.lane.b32.xlu0 %v823, 104
        %v998 = vpop.permute.xlu0 %997
        %999 = vrot.lane.b32.xlu0 %v824, 72
        %v1000 = vpop.permute.xlu0 %999
        %v1002 = vsel %vm828, %v998, 0
        %v1005 = vsel %vm828, %v1000, 0
        %1007 = vmatpush.bf16.xpose.msra.mxu0 0
        %1008 = vmatpush.bf16.xpose.msra.mxu0 0
        %1009 = vmatpush.bf16.xpose.msra.mxu0 0
        %1010 = vmatpush.bf16.xpose.msra.mxu0 0
        %1011 = vmatpush.bf16.xpose.msra.mxu0 0
        %1012 = vmatpush.bf16.xpose.msra.mxu0 0
        %1013 = vmatpush.bf16.xpose.msra.mxu0 0
        %1014 = vmatpush.bf16.xpose.msra.mxu0 %v1005
        %1015 = vmatmul.bf16.gmra.mxu0 %v1002
        %v1016 = vpop.f32.mrf.mxu0
        %v1017 = vadd.f32 0.0, %v1016
        %v1018 = vpop.f32.mrf.mxu0
        %1019 = vdwg.mxu0
        %v1020 = vsel %vm848, %v1017, -inf
        %1021 = vmax.xlane.f32.xlu0 %v1020
        %v1022 = vpop.xlane.xlu0 %1021
        %v1023 = vsub.f32 %v1017, %v1022
        %v1024 = vmul.f32 %v1023, 1.442695
        %v1025 = vpow.pop %v1024
        %v1026 = vsel %vm848, %v1025, 0.0
        %1027 = vadd.xlane.f32.xlu0 %v1026
        %v1028 = vpop.xlane.xlu0 %1027
        %v1029 = vrcp.pop %v1028
        %v1030 = vmul.f32 %v1025, %v1029
        %v1031 = vpack.c.bf16 %v1030, %v1030
        %1032 = vrot.lane.b32.xlu0 %v824, 40
        %v1033 = vpop.permute.xlu0 %1032
        %v1035 = vsel %vm863, %v1031, 0
        %v1038 = vsel %vm867, %v1033, 0
        %1040 = vmatpush.bf16.msra.mxu0 0
        %1041 = vmatpush.bf16.msra.mxu0 0
        %1042 = vmatpush.bf16.msra.mxu0 0
        %1043 = vmatpush.bf16.msra.mxu0 0
        %1044 = vmatpush.bf16.msra.mxu0 0
        %1045 = vmatpush.bf16.msra.mxu0 0
        %1046 = vmatpush.bf16.msra.mxu0 0
        %1047 = vmatpush.bf16.msra.mxu0 %v1038
        %1048 = vmatmul.bf16.gmra.mxu0 %v1035
        %v1049 = vpop.f32.mrf.mxu0
        %v1050 = vadd.f32 0.0, %v1049
        %v1051 = vpop.f32.mrf.mxu0
        %1052 = vdwg.mxu0
        %1054 = vrot.lane.b32.xlu0 %v938, 8
        %v1055 = vpop.permute.xlu0 %1054
        %1058 = vrot.lane.b32.xlu0 %v994, 16
        %v1059 = vpop.permute.xlu0 %1058
        %1062 = vrot.lane.b32.xlu0 %v1050, 24
        %v1063 = vpop.permute.xlu0 %1062
        %v1065 = vsel %vm828, %v881, %v1055
        %vm1066 = vcmask 130048
        %v1067 = vsel %vm1066, %v1065, %v1059
        %vm1068 = vcmask 195584
        %v1069 = vsel %vm1068, %v1067, %v1063
        %v1070 = vld [vmem:[%s8] sm:$0xf]
        %v1071 = vld [vmem:[%s8 + $0x4] sm:$0xf]
        %v1072 = vld [vmem:[%s8 + $0x8] sm:$0xf]
        %v1073 = vld [vmem:[%s8 + $0xc] sm:$0xf]
        %v1074 = vpack.c.bf16 %v1069, %v1069
        %v1075 = vld [vmem:[%s9] sm:$0x1]
        %v1077 = vperm.slane %v1075, 0
        %v1083 = vunpack.c.l.b16 %v1070
        %v1084 = vunpack.c.l.b16 %v1071
        %v1085 = vunpack.c.l.b16 %v1072
        %v1086 = vunpack.c.l.b16 %v1073
        %v1087 = vpack.c.b16 %v1084, %v1083
        %v1088 = vpack.c.b16 %v1086, %v1085
        %v1092 = vsel %vm805, %v1074, 0
        %1094 = vmatpush.bf16.msra.mxu0 0
        %1095 = vmatpush.bf16.msra.mxu0 0
        %1096 = vmatpush.bf16.msra.mxu0 0
        %1097 = vmatpush.bf16.msra.mxu0 0
        %1098 = vmatpush.bf16.msra.mxu0 0
        %1099 = vmatpush.bf16.msra.mxu0 0
        %1100 = vmatpush.bf16.msra.mxu0 %v1088
        %1101 = vmatpush.bf16.msra.mxu0 %v1087
        %1102 = vmatmul.bf16.gmra.mxu0 %v1092
        %v1103 = vpop.f32.mrf.mxu0
        %v1104 = vadd.f32 %v1077, %v1103
        %v1105 = vpop.f32.mrf.mxu0
        %1106 = vdwg.mxu0
        %v1107 = vadd.f32 %v743, %v1104
        %v1108 = vld [vmem:[%s10] sm:$0x1]
        %v1109 = vld [vmem:[%s11] sm:$0x1]
        %v1110 = vsel %vm746, %v1107, 0.0
        %1111 = vadd.xlane.f32.xlu0 %v1110
        %v1112 = vpop.xlane.xlu0 %1111
        %v1113 = vmul.f32 %v1112, %v756
        %v1114 = vsub.f32 %v1107, %v1113
        %v1115 = vmul.f32 %v1114, %v1114
        %v1116 = vsel %vm746, %v1115, 0.0
        %1117 = vadd.xlane.f32.xlu0 %v1116
        %v1118 = vpop.xlane.xlu0 %1117
        %v1119 = vmul.f32 %v1118, %v756
        %v1120 = vadd.f32 %v1119, 1e-06
        %v1121 = vrsqrt.pop %v1120
        %v1122 = vmul.f32 %v1121, %v1120
        %v1123 = vmul.f32 %v1122, %v1121
        %v1124 = vmul.f32 0.5, %v1123
        %v1125 = vsub.f32 1.5, %v1124
        %v1126 = vmul.f32 %v1121, %v1125
        %vm1127 = vweird.f32 %v1120
        %vm1128 = vweird.f32 %v1121
        %vm1129 = vmor %vm1127, %vm1128
        %v1130 = vsel %vm1129, %v1121, %v1126
        %v1131 = vmul.f32 %v1114, %v1130
        %v1133 = vperm.slane %v1108, 0
        %v1135 = vmul.f32 %v1131, %v1133
        %v1137 = vperm.slane %v1109, 0
        %v1139 = vadd.f32 %v1135, %v1137
        %v1140 = vld [vmem:[%s12] sm:$0xf]
        %v1141 = vld [vmem:[%s12 + $0x4] sm:$0xf]
        %v1142 = vld [vmem:[%s12 + $0x8] sm:$0xf]
        %v1143 = vld [vmem:[%s12 + $0xc] sm:$0xf]
        %v1144 = vpack.c.bf16 %v1139, %v1139
        %v1145 = vld [vmem:[%s13] sm:$0x1]
        %v1147 = vperm.slane %v1145, 0
        %v1153 = vunpack.c.l.b16 %v1140
        %v1154 = vunpack.c.l.b16 %v1141
        %v1155 = vunpack.c.l.b16 %v1142
        %v1156 = vunpack.c.l.b16 %v1143
        %v1157 = vpack.c.b16 %v1154, %v1153
        %v1158 = vpack.c.b16 %v1156, %v1155
        %v1162 = vsel %vm805, %v1144, 0
        %1164 = vmatpush.bf16.msra.mxu0 0
        %1165 = vmatpush.bf16.msra.mxu0 0
        %1166 = vmatpush.bf16.msra.mxu0 0
        %1167 = vmatpush.bf16.msra.mxu0 0
        %1168 = vmatpush.bf16.msra.mxu0 0
        %1169 = vmatpush.bf16.msra.mxu0 0
        %1170 = vmatpush.bf16.msra.mxu0 %v1158
        %1171 = vmatpush.bf16.msra.mxu0 %v1157
        %1172 = vmatmul.bf16.gmra.mxu0 %v1162
        %v1173 = vpop.f32.mrf.mxu0
        %v1174 = vadd.f32 %v1147, %v1173
        %v1175 = vpop.f32.mrf.mxu0
        %1176 = vdwg.mxu0
        %v1177 = vmul.f32 %v1174, %v1174
        %v1178 = vmul.f32 %v1174, %v1177
        %v1179 = vmul.f32 %v1178, 0.044715
        %v1180 = vadd.f32 %v1174, %v1179
        %v1181 = vmul.f32 %v1180, 0.7978846
        %v1182 = vtanh.pop %v1181
        %v1183 = vadd.f32 %v1182, 1.0
        %v1184 = vmul.f32 %v1183, 0.5
        %v1185 = vmul.f32 %v1174, %v1184
        %v1186 = vld [vmem:[%s14] sm:$0xf]
        %v1187 = vld [vmem:[%s14 + $0x4] sm:$0xf]
        %v1188 = vld [vmem:[%s14 + $0x8] sm:$0xf]
        %v1189 = vld [vmem:[%s14 + $0xc] sm:$0xf]
        %v1190 = vld [vmem:[%s14 + $0x10] sm:$0xf]
        %v1191 = vld [vmem:[%s14 + $0x14] sm:$0xf]
        %v1192 = vld [vmem:[%s14 + $0x18] sm:$0xf]
        %v1193 = vld [vmem:[%s14 + $0x1c] sm:$0xf]
        %v1194 = vld [vmem:[%s14 + $0x20] sm:$0xf]
        %v1195 = vld [vmem:[%s14 + $0x24] sm:$0xf]
        %v1196 = vld [vmem:[%s14 + $0x28] sm:$0xf]
        %v1197 = vld [vmem:[%s14 + $0x2c] sm:$0xf]
        %v1198 = vld [vmem:[%s14 + $0x30] sm:$0xf]
        %v1199 = vld [vmem:[%s14 + $0x34] sm:$0xf]
        %v1200 = vld [vmem:[%s14 + $0x38] sm:$0xf]
        %v1201 = vld [vmem:[%s14 + $0x3c] sm:$0xf]
        %v1202 = vpack.c.bf16 %v1185, %v1185
        %v1203 = vld [vmem:[%s15] sm:$0x1]
        %v1205 = vperm.slane %v1203, 0
        %v1223 = vunpack.c.l.b16 %v1186
        %v1224 = vunpack.c.l.b16 %v1187
        %v1225 = vunpack.c.l.b16 %v1188
        %v1226 = vunpack.c.l.b16 %v1189
        %v1227 = vunpack.c.l.b16 %v1190
        %v1228 = vunpack.c.l.b16 %v1191
        %v1229 = vunpack.c.l.b16 %v1192
        %v1230 = vunpack.c.l.b16 %v1193
        %v1231 = vunpack.c.l.b16 %v1194
        %v1232 = vunpack.c.l.b16 %v1195
        %v1233 = vunpack.c.l.b16 %v1196
        %v1234 = vunpack.c.l.b16 %v1197
        %v1235 = vunpack.c.l.b16 %v1198
        %v1236 = vunpack.c.l.b16 %v1199
        %v1237 = vunpack.c.l.b16 %v1200
        %v1238 = vunpack.c.l.b16 %v1201
        %v1239 = vpack.c.b16 %v1224, %v1223
        %v1240 = vpack.c.b16 %v1226, %v1225
        %v1241 = vpack.c.b16 %v1228, %v1227
        %v1242 = vpack.c.b16 %v1230, %v1229
        %v1243 = vpack.c.b16 %v1232, %v1231
        %v1244 = vpack.c.b16 %v1234, %v1233
        %v1245 = vpack.c.b16 %v1236, %v1235
        %v1246 = vpack.c.b16 %v1238, %v1237
        %1255 = vmatpush.bf16.msra.mxu0 %v1246
        %1256 = vmatpush.bf16.msra.mxu0 %v1245
        %1257 = vmatpush.bf16.msra.mxu0 %v1244
        %1258 = vmatpush.bf16.msra.mxu0 %v1243
        %1259 = vmatpush.bf16.msra.mxu0 %v1242
        %1260 = vmatpush.bf16.msra.mxu0 %v1241
        %1261 = vmatpush.bf16.msra.mxu0 %v1240
        %1262 = vmatpush.bf16.msra.mxu0 %v1239
        %1263 = vmatmul.bf16.gmra.mxu0 %v1202
        %v1264 = vpop.f32.mrf.mxu0
        %v1265 = vadd.f32 %v1205, %v1264
        %v1266 = vpop.f32.mrf.mxu0
        %1267 = vdwg.mxu0
        %v1268 = vadd.f32 %v1107, %v1265
        %s1269 = scalar_lea.vmem %s4, 1
        %v1270 = vld [vmem:[%s1269] sm:$0x1]
        %s1271 = scalar_lea.vmem %s5, 1
        %v1272 = vld [vmem:[%s1271] sm:$0x1]
        %v1273 = vsel %vm746, %v1268, 0.0
        %1274 = vadd.xlane.f32.xlu0 %v1273
        %v1275 = vpop.xlane.xlu0 %1274
        %v1276 = vmul.f32 %v1275, %v756
        %v1277 = vsub.f32 %v1268, %v1276
        %v1278 = vmul.f32 %v1277, %v1277
        %v1279 = vsel %vm746, %v1278, 0.0
        %1280 = vadd.xlane.f32.xlu0 %v1279
        %v1281 = vpop.xlane.xlu0 %1280
        %v1282 = vmul.f32 %v1281, %v756
        %v1283 = vadd.f32 %v1282, 1e-06
        %v1284 = vrsqrt.pop %v1283
        %v1285 = vmul.f32 %v1284, %v1283
        %v1286 = vmul.f32 %v1285, %v1284
        %v1287 = vmul.f32 0.5, %v1286
        %v1288 = vsub.f32 1.5, %v1287
        %v1289 = vmul.f32 %v1284, %v1288
        %vm1290 = vweird.f32 %v1283
        %vm1291 = vweird.f32 %v1284
        %vm1292 = vmor %vm1290, %vm1291
        %v1293 = vsel %vm1292, %v1284, %v1289
        %v1294 = vmul.f32 %v1277, %v1293
        %v1296 = vperm.slane %v1270, 0
        %v1298 = vmul.f32 %v1294, %v1296
        %v1300 = vperm.slane %v1272, 0
        %v1302 = vadd.f32 %v1298, %v1300
        %s1303 = scalar_lea.vmem %s6, 16
        %v1304 = vld [vmem:[%s1303] sm:$0xf]
        %v1305 = vld [vmem:[%s1303 + $0x4] sm:$0xf]
        %v1306 = vld [vmem:[%s1303 + $0x8] sm:$0xf]
        %v1307 = vld [vmem:[%s1303 + $0xc] sm:$0xf]
        %v1308 = vpack.c.bf16 %v1302, %v1302
        %s1309 = scalar_lea.vmem %s7, 1
        %v1310 = vld [vmem:[%s1309] sm:$0x1]
        %v1312 = vperm.slane %v1310, 0
        %v1318 = vunpack.c.l.b16 %v1304
        %v1319 = vunpack.c.l.b16 %v1305
        %v1320 = vunpack.c.l.b16 %v1306
        %v1321 = vunpack.c.l.b16 %v1307
        %v1322 = vpack.c.b16 %v1319, %v1318
        %v1323 = vpack.c.b16 %v1321, %v1320
        %v1327 = vsel %vm805, %v1308, 0
        %1329 = vmatpush.bf16.msra.mxu0 0
        %1330 = vmatpush.bf16.msra.mxu0 0
        %1331 = vmatpush.bf16.msra.mxu0 0
        %1332 = vmatpush.bf16.msra.mxu0 0
        %1333 = vmatpush.bf16.msra.mxu0 0
        %1334 = vmatpush.bf16.msra.mxu0 0
        %1335 = vmatpush.bf16.msra.mxu0 %v1323
        %1336 = vmatpush.bf16.msra.mxu0 %v1322
        %1337 = vmatmul.bf16.gmra.mxu0 %v1327
        %v1338 = vpop.f32.mrf.mxu0
        %v1339 = vadd.f32 %v1312, %v1338
        %v1340 = vpop.f32.mrf.mxu0
        %1341 = vdwg.mxu0
        %v1342 = vmul.f32 %v1339, 0.35355338
        %v1343 = vpack.c.bf16 %v1342, %v1342
        %v1344 = vpack.c.bf16 %v1339, %v1339
        %1346 = vrot.lane.b32.xlu0 %v1344, 96
        %v1347 = vpop.permute.xlu0 %1346
        %v1349 = vsel %vm828, %v1343, 0
        %v1352 = vsel %vm828, %v1347, 0
        %1354 = vmatpush.bf16.xpose.msra.mxu0 0
        %1355 = vmatpush.bf16.xpose.msra.mxu0 0
        %1356 = vmatpush.bf16.xpose.msra.mxu0 0
        %1357 = vmatpush.bf16.xpose.msra.mxu0 0
        %1358 = vmatpush.bf16.xpose.msra.mxu0 0
        %1359 = vmatpush.bf16.xpose.msra.mxu0 0
        %1360 = vmatpush.bf16.xpose.msra.mxu0 0
        %1361 = vmatpush.bf16.xpose.msra.mxu0 %v1352
        %1362 = vmatmul.bf16.gmra.mxu0 %v1349
        %v1363 = vpop.f32.mrf.mxu0
        %v1364 = vadd.f32 0.0, %v1363
        %v1365 = vpop.f32.mrf.mxu0
        %1366 = vdwg.mxu0
        %v1367 = vsel %vm848, %v1364, -inf
        %1368 = vmax.xlane.f32.xlu0 %v1367
        %v1369 = vpop.xlane.xlu0 %1368
        %v1370 = vsub.f32 %v1364, %v1369
        %v1371 = vmul.f32 %v1370, 1.442695
        %v1372 = vpow.pop %v1371
        %v1373 = vsel %vm848, %v1372, 0.0
        %1374 = vadd.xlane.f32.xlu0 %v1373
        %v1375 = vpop.xlane.xlu0 %1374
        %v1376 = vrcp.pop %v1375
        %v1377 = vmul.f32 %v1372, %v1376
        %v1378 = vpack.c.bf16 %v1377, %v1377
        %1379 = vrot.lane.b32.xlu0 %v1344, 64
        %v1380 = vpop.permute.xlu0 %1379
        %v1382 = vsel %vm863, %v1378, 0
        %v1385 = vsel %vm867, %v1380, 0
        %1387 = vmatpush.bf16.msra.mxu0 0
        %1388 = vmatpush.bf16.msra.mxu0 0
        %1389 = vmatpush.bf16.msra.mxu0 0
        %1390 = vmatpush.bf16.msra.mxu0 0
        %1391 = vmatpush.bf16.msra.mxu0 0
        %1392 = vmatpush.bf16.msra.mxu0 0
        %1393 = vmatpush.bf16.msra.mxu0 0
        %1394 = vmatpush.bf16.msra.mxu0 %v1385
        %1395 = vmatmul.bf16.gmra.mxu0 %v1382
        %v1396 = vpop.f32.mrf.mxu0
        %v1397 = vadd.f32 0.0, %v1396
        %v1398 = vpop.f32.mrf.mxu0
        %1399 = vdwg.mxu0
        %1401 = vrot.lane.b32.xlu0 %v1343, 120
        %v1402 = vpop.permute.xlu0 %1401
        %1403 = vrot.lane.b32.xlu0 %v1344, 88
        %v1404 = vpop.permute.xlu0 %1403
        %v1406 = vsel %vm828, %v1402, 0
        %v1409 = vsel %vm828, %v1404, 0
        %1411 = vmatpush.bf16.xpose.msra.mxu0 0
        %1412 = vmatpush.bf16.xpose.msra.mxu0 0
        %1413 = vmatpush.bf16.xpose.msra.mxu0 0
        %1414 = vmatpush.bf16.xpose.msra.mxu0 0
        %1415 = vmatpush.bf16.xpose.msra.mxu0 0
        %1416 = vmatpush.bf16.xpose.msra.mxu0 0
        %1417 = vmatpush.bf16.xpose.msra.mxu0 0
        %1418 = vmatpush.bf16.xpose.msra.mxu0 %v1409
        %1419 = vmatmul.bf16.gmra.mxu0 %v1406
        %v1420 = vpop.f32.mrf.mxu0
        %v1421 = vadd.f32 0.0, %v1420
        %v1422 = vpop.f32.mrf.mxu0
        %1423 = vdwg.mxu0
        %v1424 = vsel %vm848, %v1421, -inf
        %1425 = vmax.xlane.f32.xlu0 %v1424
        %v1426 = vpop.xlane.xlu0 %1425
        %v1427 = vsub.f32 %v1421, %v1426
        %v1428 = vmul.f32 %v1427, 1.442695
        %v1429 = vpow.pop %v1428
        %v1430 = vsel %vm848, %v1429, 0.0
        %1431 = vadd.xlane.f32.xlu0 %v1430
        %v1432 = vpop.xlane.xlu0 %1431
        %v1433 = vrcp.pop %v1432
        %v1434 = vmul.f32 %v1429, %v1433
        %v1435 = vpack.c.bf16 %v1434, %v1434
        %1436 = vrot.lane.b32.xlu0 %v1344, 56
        %v1437 = vpop.permute.xlu0 %1436
        %v1439 = vsel %vm863, %v1435, 0
        %v1442 = vsel %vm867, %v1437, 0
        %1444 = vmatpush.bf16.msra.mxu0 0
        %1445 = vmatpush.bf16.msra.mxu0 0
        %1446 = vmatpush.bf16.msra.mxu0 0
        %1447 = vmatpush.bf16.msra.mxu0 0
        %1448 = vmatpush.bf16.msra.mxu0 0
        %1449 = vmatpush.bf16.msra.mxu0 0
        %1450 = vmatpush.bf16.msra.mxu0 0
        %1451 = vmatpush.bf16.msra.mxu0 %v1442
        %1452 = vmatmul.bf16.gmra.mxu0 %v1439
        %v1453 = vpop.f32.mrf.mxu0
        %v1454 = vadd.f32 0.0, %v1453
        %v1455 = vpop.f32.mrf.mxu0
        %1456 = vdwg.mxu0
        %1457 = vrot.lane.b32.xlu0 %v1343, 112
        %v1458 = vpop.permute.xlu0 %1457
        %1459 = vrot.lane.b32.xlu0 %v1344, 80
        %v1460 = vpop.permute.xlu0 %1459
        %v1462 = vsel %vm828, %v1458, 0
        %v1465 = vsel %vm828, %v1460, 0
        %1467 = vmatpush.bf16.xpose.msra.mxu0 0
        %1468 = vmatpush.bf16.xpose.msra.mxu0 0
        %1469 = vmatpush.bf16.xpose.msra.mxu0 0
        %1470 = vmatpush.bf16.xpose.msra.mxu0 0
        %1471 = vmatpush.bf16.xpose.msra.mxu0 0
        %1472 = vmatpush.bf16.xpose.msra.mxu0 0
        %1473 = vmatpush.bf16.xpose.msra.mxu0 0
        %1474 = vmatpush.bf16.xpose.msra.mxu0 %v1465
        %1475 = vmatmul.bf16.gmra.mxu0 %v1462
        %v1476 = vpop.f32.mrf.mxu0
        %v1477 = vadd.f32 0.0, %v1476
        %v1478 = vpop.f32.mrf.mxu0
        %1479 = vdwg.mxu0
        %v1480 = vsel %vm848, %v1477, -inf
        %1481 = vmax.xlane.f32.xlu0 %v1480
        %v1482 = vpop.xlane.xlu0 %1481
        %v1483 = vsub.f32 %v1477, %v1482
        %v1484 = vmul.f32 %v1483, 1.442695
        %v1485 = vpow.pop %v1484
        %v1486 = vsel %vm848, %v1485, 0.0
        %1487 = vadd.xlane.f32.xlu0 %v1486
        %v1488 = vpop.xlane.xlu0 %1487
        %v1489 = vrcp.pop %v1488
        %v1490 = vmul.f32 %v1485, %v1489
        %v1491 = vpack.c.bf16 %v1490, %v1490
        %1492 = vrot.lane.b32.xlu0 %v1344, 48
        %v1493 = vpop.permute.xlu0 %1492
        %v1495 = vsel %vm863, %v1491, 0
        %v1498 = vsel %vm867, %v1493, 0
        %1500 = vmatpush.bf16.msra.mxu0 0
        %1501 = vmatpush.bf16.msra.mxu0 0
        %1502 = vmatpush.bf16.msra.mxu0 0
        %1503 = vmatpush.bf16.msra.mxu0 0
        %1504 = vmatpush.bf16.msra.mxu0 0
        %1505 = vmatpush.bf16.msra.mxu0 0
        %1506 = vmatpush.bf16.msra.mxu0 0
        %1507 = vmatpush.bf16.msra.mxu0 %v1498
        %1508 = vmatmul.bf16.gmra.mxu0 %v1495
        %v1509 = vpop.f32.mrf.mxu0
        %v1510 = vadd.f32 0.0, %v1509
        %v1511 = vpop.f32.mrf.mxu0
        %1512 = vdwg.mxu0
        %1513 = vrot.lane.b32.xlu0 %v1343, 104
        %v1514 = vpop.permute.xlu0 %1513
        %1515 = vrot.lane.b32.xlu0 %v1344, 72
        %v1516 = vpop.permute.xlu0 %1515
        %v1518 = vsel %vm828, %v1514, 0
        %v1521 = vsel %vm828, %v1516, 0
        %1523 = vmatpush.bf16.xpose.msra.mxu0 0
        %1524 = vmatpush.bf16.xpose.msra.mxu0 0
        %1525 = vmatpush.bf16.xpose.msra.mxu0 0
        %1526 = vmatpush.bf16.xpose.msra.mxu0 0
        %1527 = vmatpush.bf16.xpose.msra.mxu0 0
        %1528 = vmatpush.bf16.xpose.msra.mxu0 0
        %1529 = vmatpush.bf16.xpose.msra.mxu0 0
        %1530 = vmatpush.bf16.xpose.msra.mxu0 %v1521
        %1531 = vmatmul.bf16.gmra.mxu0 %v1518
        %v1532 = vpop.f32.mrf.mxu0
        %v1533 = vadd.f32 0.0, %v1532
        %v1534 = vpop.f32.mrf.mxu0
        %1535 = vdwg.mxu0
        %v1536 = vsel %vm848, %v1533, -inf
        %1537 = vmax.xlane.f32.xlu0 %v1536
        %v1538 = vpop.xlane.xlu0 %1537
        %v1539 = vsub.f32 %v1533, %v1538
        %v1540 = vmul.f32 %v1539, 1.442695
        %v1541 = vpow.pop %v1540
        %v1542 = vsel %vm848, %v1541, 0.0
        %1543 = vadd.xlane.f32.xlu0 %v1542
        %v1544 = vpop.xlane.xlu0 %1543
        %v1545 = vrcp.pop %v1544
        %v1546 = vmul.f32 %v1541, %v1545
        %v1547 = vpack.c.bf16 %v1546, %v1546
        %1548 = vrot.lane.b32.xlu0 %v1344, 40
        %v1549 = vpop.permute.xlu0 %1548
        %v1551 = vsel %vm863, %v1547, 0
        %v1554 = vsel %vm867, %v1549, 0
        %1556 = vmatpush.bf16.msra.mxu0 0
        %1557 = vmatpush.bf16.msra.mxu0 0
        %1558 = vmatpush.bf16.msra.mxu0 0
        %1559 = vmatpush.bf16.msra.mxu0 0
        %1560 = vmatpush.bf16.msra.mxu0 0
        %1561 = vmatpush.bf16.msra.mxu0 0
        %1562 = vmatpush.bf16.msra.mxu0 0
        %1563 = vmatpush.bf16.msra.mxu0 %v1554
        %1564 = vmatmul.bf16.gmra.mxu0 %v1551
        %v1565 = vpop.f32.mrf.mxu0
        %v1566 = vadd.f32 0.0, %v1565
        %v1567 = vpop.f32.mrf.mxu0
        %1568 = vdwg.mxu0
        %1570 = vrot.lane.b32.xlu0 %v1454, 8
        %v1571 = vpop.permute.xlu0 %1570
        %1574 = vrot.lane.b32.xlu0 %v1510, 16
        %v1575 = vpop.permute.xlu0 %1574
        %1578 = vrot.lane.b32.xlu0 %v1566, 24
        %v1579 = vpop.permute.xlu0 %1578
        %v1581 = vsel %vm828, %v1397, %v1571
        %v1582 = vsel %vm1066, %v1581, %v1575
        %v1583 = vsel %vm1068, %v1582, %v1579
        %s1584 = scalar_lea.vmem %s8, 16
        %v1585 = vld [vmem:[%s1584] sm:$0xf]
        %v1586 = vld [vmem:[%s1584 + $0x4] sm:$0xf]
        %v1587 = vld [vmem:[%s1584 + $0x8] sm:$0xf]
        %v1588 = vld [vmem:[%s1584 + $0xc] sm:$0xf]
        %v1589 = vpack.c.bf16 %v1583, %v1583
        %s1590 = scalar_lea.vmem %s9, 1
        %v1591 = vld [vmem:[%s1590] sm:$0x1]
        %v1593 = vperm.slane %v1591, 0
        %v1599 = vunpack.c.l.b16 %v1585
        %v1600 = vunpack.c.l.b16 %v1586
        %v1601 = vunpack.c.l.b16 %v1587
        %v1602 = vunpack.c.l.b16 %v1588
        %v1603 = vpack.c.b16 %v1600, %v1599
        %v1604 = vpack.c.b16 %v1602, %v1601
        %v1608 = vsel %vm805, %v1589, 0
        %1610 = vmatpush.bf16.msra.mxu0 0
        %1611 = vmatpush.bf16.msra.mxu0 0
        %1612 = vmatpush.bf16.msra.mxu0 0
        %1613 = vmatpush.bf16.msra.mxu0 0
        %1614 = vmatpush.bf16.msra.mxu0 0
        %1615 = vmatpush.bf16.msra.mxu0 0
        %1616 = vmatpush.bf16.msra.mxu0 %v1604
        %1617 = vmatpush.bf16.msra.mxu0 %v1603
        %1618 = vmatmul.bf16.gmra.mxu0 %v1608
        %v1619 = vpop.f32.mrf.mxu0
        %v1620 = vadd.f32 %v1593, %v1619
        %v1621 = vpop.f32.mrf.mxu0
        %1622 = vdwg.mxu0
        %v1623 = vadd.f32 %v1268, %v1620
        %s1624 = scalar_lea.vmem %s10, 1
        %v1625 = vld [vmem:[%s1624] sm:$0x1]
        %s1626 = scalar_lea.vmem %s11, 1
        %v1627 = vld [vmem:[%s1626] sm:$0x1]
        %v1628 = vsel %vm746, %v1623, 0.0
        %1629 = vadd.xlane.f32.xlu0 %v1628
        %v1630 = vpop.xlane.xlu0 %1629
        %v1631 = vmul.f32 %v1630, %v756
        %v1632 = vsub.f32 %v1623, %v1631
        %v1633 = vmul.f32 %v1632, %v1632
        %v1634 = vsel %vm746, %v1633, 0.0
        %1635 = vadd.xlane.f32.xlu0 %v1634
        %v1636 = vpop.xlane.xlu0 %1635
        %v1637 = vmul.f32 %v1636, %v756
        %v1638 = vadd.f32 %v1637, 1e-06
        %v1639 = vrsqrt.pop %v1638
        %v1640 = vmul.f32 %v1639, %v1638
        %v1641 = vmul.f32 %v1640, %v1639
        %v1642 = vmul.f32 0.5, %v1641
        %v1643 = vsub.f32 1.5, %v1642
        %v1644 = vmul.f32 %v1639, %v1643
        %vm1645 = vweird.f32 %v1638
        %vm1646 = vweird.f32 %v1639
        %vm1647 = vmor %vm1645, %vm1646
        %v1648 = vsel %vm1647, %v1639, %v1644
        %v1649 = vmul.f32 %v1632, %v1648
        %v1651 = vperm.slane %v1625, 0
        %v1653 = vmul.f32 %v1649, %v1651
        %v1655 = vperm.slane %v1627, 0
        %v1657 = vadd.f32 %v1653, %v1655
        %s1658 = scalar_lea.vmem %s12, 16
        %v1659 = vld [vmem:[%s1658] sm:$0xf]
        %v1660 = vld [vmem:[%s1658 + $0x4] sm:$0xf]
        %v1661 = vld [vmem:[%s1658 + $0x8] sm:$0xf]
        %v1662 = vld [vmem:[%s1658 + $0xc] sm:$0xf]
        %v1663 = vpack.c.bf16 %v1657, %v1657
        %s1664 = scalar_lea.vmem %s13, 1
        %v1665 = vld [vmem:[%s1664] sm:$0x1]
        %v1667 = vperm.slane %v1665, 0
        %v1673 = vunpack.c.l.b16 %v1659
        %v1674 = vunpack.c.l.b16 %v1660
        %v1675 = vunpack.c.l.b16 %v1661
        %v1676 = vunpack.c.l.b16 %v1662
        %v1677 = vpack.c.b16 %v1674, %v1673
        %v1678 = vpack.c.b16 %v1676, %v1675
        %v1682 = vsel %vm805, %v1663, 0
        %1684 = vmatpush.bf16.msra.mxu0 0
        %1685 = vmatpush.bf16.msra.mxu0 0
        %1686 = vmatpush.bf16.msra.mxu0 0
        %1687 = vmatpush.bf16.msra.mxu0 0
        %1688 = vmatpush.bf16.msra.mxu0 0
        %1689 = vmatpush.bf16.msra.mxu0 0
        %1690 = vmatpush.bf16.msra.mxu0 %v1678
        %1691 = vmatpush.bf16.msra.mxu0 %v1677
        %1692 = vmatmul.bf16.gmra.mxu0 %v1682
        %v1693 = vpop.f32.mrf.mxu0
        %v1694 = vadd.f32 %v1667, %v1693
        %v1695 = vpop.f32.mrf.mxu0
        %1696 = vdwg.mxu0
        %v1697 = vmul.f32 %v1694, %v1694
        %v1698 = vmul.f32 %v1694, %v1697
        %v1699 = vmul.f32 %v1698, 0.044715
        %v1700 = vadd.f32 %v1694, %v1699
        %v1701 = vmul.f32 %v1700, 0.7978846
        %v1702 = vtanh.pop %v1701
        %v1703 = vadd.f32 %v1702, 1.0
        %v1704 = vmul.f32 %v1703, 0.5
        %v1705 = vmul.f32 %v1694, %v1704
        %s1706 = scalar_lea.vmem %s14, 64
        %v1707 = vld [vmem:[%s1706] sm:$0xf]
        %v1708 = vld [vmem:[%s1706 + $0x4] sm:$0xf]
        %v1709 = vld [vmem:[%s1706 + $0x8] sm:$0xf]
        %v1710 = vld [vmem:[%s1706 + $0xc] sm:$0xf]
        %v1711 = vld [vmem:[%s1706 + $0x10] sm:$0xf]
        %v1712 = vld [vmem:[%s1706 + $0x14] sm:$0xf]
        %v1713 = vld [vmem:[%s1706 + $0x18] sm:$0xf]
        %v1714 = vld [vmem:[%s1706 + $0x1c] sm:$0xf]
        %v1715 = vld [vmem:[%s1706 + $0x20] sm:$0xf]
        %v1716 = vld [vmem:[%s1706 + $0x24] sm:$0xf]
        %v1717 = vld [vmem:[%s1706 + $0x28] sm:$0xf]
        %v1718 = vld [vmem:[%s1706 + $0x2c] sm:$0xf]
        %v1719 = vld [vmem:[%s1706 + $0x30] sm:$0xf]
        %v1720 = vld [vmem:[%s1706 + $0x34] sm:$0xf]
        %v1721 = vld [vmem:[%s1706 + $0x38] sm:$0xf]
        %v1722 = vld [vmem:[%s1706 + $0x3c] sm:$0xf]
        %v1723 = vpack.c.bf16 %v1705, %v1705
        %s1724 = scalar_lea.vmem %s15, 1
        %v1725 = vld [vmem:[%s1724] sm:$0x1]
        %v1727 = vperm.slane %v1725, 0
        %v1745 = vunpack.c.l.b16 %v1707
        %v1746 = vunpack.c.l.b16 %v1708
        %v1747 = vunpack.c.l.b16 %v1709
        %v1748 = vunpack.c.l.b16 %v1710
        %v1749 = vunpack.c.l.b16 %v1711
        %v1750 = vunpack.c.l.b16 %v1712
        %v1751 = vunpack.c.l.b16 %v1713
        %v1752 = vunpack.c.l.b16 %v1714
        %v1753 = vunpack.c.l.b16 %v1715
        %v1754 = vunpack.c.l.b16 %v1716
        %v1755 = vunpack.c.l.b16 %v1717
        %v1756 = vunpack.c.l.b16 %v1718
        %v1757 = vunpack.c.l.b16 %v1719
        %v1758 = vunpack.c.l.b16 %v1720
        %v1759 = vunpack.c.l.b16 %v1721
        %v1760 = vunpack.c.l.b16 %v1722
        %v1761 = vpack.c.b16 %v1746, %v1745
        %v1762 = vpack.c.b16 %v1748, %v1747
        %v1763 = vpack.c.b16 %v1750, %v1749
        %v1764 = vpack.c.b16 %v1752, %v1751
        %v1765 = vpack.c.b16 %v1754, %v1753
        %v1766 = vpack.c.b16 %v1756, %v1755
        %v1767 = vpack.c.b16 %v1758, %v1757
        %v1768 = vpack.c.b16 %v1760, %v1759
        %1777 = vmatpush.bf16.msra.mxu0 %v1768
        %1778 = vmatpush.bf16.msra.mxu0 %v1767
        %1779 = vmatpush.bf16.msra.mxu0 %v1766
        %1780 = vmatpush.bf16.msra.mxu0 %v1765
        %1781 = vmatpush.bf16.msra.mxu0 %v1764
        %1782 = vmatpush.bf16.msra.mxu0 %v1763
        %1783 = vmatpush.bf16.msra.mxu0 %v1762
        %1784 = vmatpush.bf16.msra.mxu0 %v1761
        %1785 = vmatmul.bf16.gmra.mxu0 %v1723
        %v1786 = vpop.f32.mrf.mxu0
        %v1787 = vadd.f32 %v1727, %v1786
        %v1788 = vpop.f32.mrf.mxu0
        %1789 = vdwg.mxu0
        %v1790 = vadd.f32 %v1623, %v1787
        %v1791 = vld [vmem:[%s16] sm:$0x1]
        %v1792 = vld [vmem:[%s17] sm:$0x1]
        %v1793 = vsel %vm746, %v1790, 0.0
        %1794 = vadd.xlane.f32.xlu0 %v1793
        %v1795 = vpop.xlane.xlu0 %1794
        %v1796 = vmul.f32 %v1795, %v756
        %v1797 = vsub.f32 %v1790, %v1796
        %v1798 = vmul.f32 %v1797, %v1797
        %v1799 = vsel %vm746, %v1798, 0.0
        %1800 = vadd.xlane.f32.xlu0 %v1799
        %v1801 = vpop.xlane.xlu0 %1800
        %v1802 = vmul.f32 %v1801, %v756
        %v1803 = vadd.f32 %v1802, 1e-06
        %v1804 = vrsqrt.pop %v1803
        %v1805 = vmul.f32 %v1804, %v1803
        %v1806 = vmul.f32 %v1805, %v1804
        %v1807 = vmul.f32 0.5, %v1806
        %v1808 = vsub.f32 1.5, %v1807
        %v1809 = vmul.f32 %v1804, %v1808
        %vm1810 = vweird.f32 %v1803
        %vm1811 = vweird.f32 %v1804
        %vm1812 = vmor %vm1810, %vm1811
        %v1813 = vsel %vm1812, %v1804, %v1809
        %v1814 = vmul.f32 %v1797, %v1813
        %v1816 = vperm.slane %v1791, 0
        %v1818 = vmul.f32 %v1814, %v1816
        %v1820 = vperm.slane %v1792, 0
        %v1822 = vadd.f32 %v1818, %v1820
        %1823 = vst.msk [vmem:[%s568] sm:$0xf] %vm746, %v1822
        %s1824 = sand.u32 %s423, 1
        %s1825 = scalar_lea.sflag [#allocation3], %s1824
        %s1826 = sand.u32 %s423, 1
        %s1827 = smul.addr %s1826, 4
        %s1828 = scalar_lea.vmem [#allocation2], %s1827
        // Predicated region
        $region93: #{upstream_expert_forward.1} parent=91 // pred_check
          %p1829 = pneg %p433
        $region94: #{upstream_expert_forward.1} parent=91 // pred_check_branch
          %1831 = sbr.rel (%p1829) target = $region96
        $region95: #{upstream_expert_forward.1} parent=91 // pred_region
          %1833 = vsyncadd %s1825, 0
          %s1834 = smul.addr %s32, 4
          %s1835 = scalar_lea.hbm %s18, %s1834
          %s1837 = sshll.u32 %s1828, 4
          %s1838 = int_to_ptr.vmem [resolvable:$true] %s1837
          %s1839 = sshll.u32 %s1835, 4
          %s1840 = int_to_ptr.hbm [resolvable:$true] %s1839
          %1842 = dma.vmem_to_hbm [thread:$0]  %s1838, 64, %s1840, %s1825
        $region96: #{upstream_expert_forward.1} parent=91 // pred_fallthru
          _
      $region92: #{upstream_expert_forward.1} parent=5 // pred_fallthru
        _
      %p1843 = scmp.le.s32.totalorder 2, %s27
      // Predicated region
      $region97: #{upstream_expert_forward.1} parent=5 // pred_check
        %p1844 = pneg %p1843
      $region98: #{upstream_expert_forward.1} parent=5 // pred_check_branch
        %1846 = sbr.rel (%p1844) target = $region100
      $region99: #{upstream_expert_forward.1} parent=5 // pred_region
        %s1847 = ssub.s32 %s27, 2
        // Predicated region
        $region101: #{upstream_expert_forward.1} parent=99 // pred_check
          %p1848 = pneg %p439
        $region102: #{upstream_expert_forward.1} parent=99 // pred_check_branch
          %1850 = sbr.rel (%p1848) target = $region104
        $region103: #{upstream_expert_forward.1} parent=99 // pred_region
          %s1851 = sand.u32 %s424, 1
          %s1852 = scalar_lea.sflag [#allocation3], %s1851
          %s1853 = sand.u32 %s424, 1
          %s1854 = smul.addr %s1853, 4
          %s1855 = scalar_lea.vmem [#allocation2], %s1854
          %1857 = dma.done %s1852, 64
        $region104: #{upstream_expert_forward.1} parent=99 // pred_fallthru
          _
      $region100: #{upstream_expert_forward.1} parent=5 // pred_fallthru
        _
    $region6: #{upstream_expert_forward.1} parent=1 // loop_footer
      %s31 = sadd.s32 1, %s27
    $region7: #{upstream_expert_forward.1} parent=1 // loop_footer_branch
      %26 = sbr.rel target = $region3
    $region8: #{upstream_expert_forward.1} parent=1 // loop_exit
      _
    %1858 = vsyncpa [#allocation3], 1
    %s1859 = scalar_lea.sflag [#allocation3], 1
    %1860 = vsyncpa %s1859, 1

</llo_original>
